<compile_context>
chip_gen: v5e
topology: v5e:2x2
jax: 0.10.0
libtpu: 0.0.40
codegen_flags: <defaults>
</compile_context>

<pallas_src>
import functools

import jax
import jax.numpy as jnp
from jax.experimental import pallas as pl
from jax.experimental.pallas import tpu as pltpu

_MIN_TILE_ROWS = 8                    # f32 sublane granularity
_MAX_TILE_ROWS = 1024
_VMEM_HEADROOM = 16 * 1024 * 1024     # room for Mosaic internal scratch


def _cdiv(a, b):
    return (a + b - 1) // b


def _round_up(n, m):
    return ((n + m - 1) // m) * m


def fuzzy_block_kernel(x_ref, wg_ref, bg_ref, lnw_ref, lnb_ref,
                       wf_ref, bf_ref, wmusg_ref, bmusg_ref,
                       out_ref, *, input_dim, fuzzy_dim, eps=1e-5):
    f32 = jnp.float32
    bf16 = jnp.bfloat16

    # gaussian_layer: Linear(D -> D).  bf16 operands, f32 MXU accumulation.
    g = jnp.dot(x_ref[...].astype(bf16), wg_ref[...],
                preferred_element_type=f32) + bg_ref[...]

    # LayerNorm over the last dim (biased variance, eps inside rsqrt).
    mean = jnp.mean(g, axis=-1, keepdims=True)
    centered = g - mean
    var = jnp.mean(centered * centered, axis=-1, keepdims=True)
    xn = centered * jax.lax.rsqrt(var + eps) * lnw_ref[...] + lnb_ref[...]

    # Store the normalized half of the concat immediately (lane-dense, D%128==0)
    # to shorten xn's live range before the next two matmuls.
    out_ref[:, :input_dim] = xn

    # fuzzy_layer: Linear(D -> F).
    ff = jnp.dot(xn.astype(bf16), wf_ref[...],
                 preferred_element_type=f32) + bf_ref[...]

    # Fused mu/sigma projections: Linear(F -> 2F); halves consumed in place.
    musg = jnp.dot(ff.astype(bf16), wmusg_ref[...],
                   preferred_element_type=f32) + bmusg_ref[...]

    sg_pre = musg[:, fuzzy_dim:]
    # numerically-stable softplus: max(x,0) + log1p(exp(-|x|))
    sigma = jnp.maximum(sg_pre, 0.0) + jnp.log1p(jnp.exp(-jnp.abs(sg_pre)))

    # Exact VPU divide: with bf16 matmuls the VALU has slack while the EUP
    # already carries exp/log1p, so an approx EUP reciprocal would only shift
    # the bottleneck (and add error).
    z = (ff - musg[:, :fuzzy_dim]) / sigma
    out_ref[:, input_dim:] = jnp.exp(-0.5 * z * z)


def _vmem_capacity_bytes():
    """Physical per-core VMEM, generation aware; conservative fallback."""
    try:
        return int(pltpu.get_tpu_info().vmem_capacity_bytes)
    except Exception:
        return 64 * 1024 * 1024   # v7x per-TC size: safe lower bound everywhere


def prepare_params(params, matmul_dtype=jnp.bfloat16):
    """One-time weight prep (hoisted out of the per-call hot path).

    Transposes torch-layout (out, in) weights to (in, out), fuses mu/sigma into
    a single (F, 2F) operand, and casts matmul weights to bf16.  Biases and
    LayerNorm params stay f32.
    """
    D = params["wg"].shape[0]
    F = params["wf"].shape[0]
    wmusg = jnp.concatenate([params["wmu"].T, params["wsg"].T], axis=1)
    bmusg = jnp.concatenate([params["bmu"], params["bsg"]], axis=0)
    return dict(
        wg=params["wg"].T.astype(matmul_dtype),
        bg=params["bg"].reshape(1, D).astype(jnp.float32),
        lnw=params["lnw"].reshape(1, D).astype(jnp.float32),
        lnb=params["lnb"].reshape(1, D).astype(jnp.float32),
        wf=params["wf"].T.astype(matmul_dtype),
        bf=params["bf"].reshape(1, F).astype(jnp.float32),
        wmusg=wmusg.astype(matmul_dtype),
        bmusg=bmusg.reshape(1, 2 * F).astype(jnp.float32),
    )


def _build_call(*, tile_b, num_tiles, b_pad, D, F, eps, vmem_limit_bytes,
                single_buffer_weights):
    if single_buffer_weights:
        # Constant-index weights/biases never change across grid steps; a single
        # VMEM copy halves their footprint vs. default double buffering.
        param_kwargs = dict(pipeline_mode=pl.Buffered(buffer_count=1))
    else:
        param_kwargs = {}

    def const_spec(shape):
        return pl.BlockSpec(shape, lambda i: (0, 0), **param_kwargs)

    in_specs = [
        pl.BlockSpec((tile_b, D), lambda i: (i, 0)),       # x: batch-tiled
        const_spec((D, D)), const_spec((1, D)),            # wg, bg
        const_spec((1, D)), const_spec((1, D)),            # lnw, lnb
        const_spec((D, F)), const_spec((1, F)),            # wf, bf
        const_spec((F, 2 * F)), const_spec((1, 2 * F)),    # wmusg, bmusg
    ]
    out_specs = pl.BlockSpec((tile_b, D + F), lambda i: (i, 0))

    kernel = functools.partial(fuzzy_block_kernel, input_dim=D, fuzzy_dim=F, eps=eps)
    return pl.pallas_call(
        kernel,
        out_shape=jax.ShapeDtypeStruct((b_pad, D + F), jnp.float32),
        grid=(num_tiles,),
        in_specs=in_specs,
        out_specs=out_specs,
        compiler_params=pltpu.CompilerParams(
            dimension_semantics=("parallel",),   # v7x: shard batch over 2 TCs
            vmem_limit_bytes=int(vmem_limit_bytes),
        ),
    )


def fuzzy_block(x, prep, *, max_tile_b=None, eps=1e-5):
    """x: (B, input_dim) f32; prep: output of prepare_params. -> (B, D+F) f32."""
    B, D = x.shape
    F = prep["wf"].shape[1]
    assert D % 128 == 0 and F % 128 == 0, (
        "pad input_dim/fuzzy_dim to multiples of 128 for lane-dense stores")

    # ---- generation-aware VMEM budget & batch-tile sizing ----
    budget = _vmem_capacity_bytes() - _VMEM_HEADROOM   # ~112 MiB v5e/v6e, ~48 MiB v7x
    w_bytes = (D * D + D * F + 2 * F * F) * jnp.dtype(prep["wg"].dtype).itemsize
    b_bytes = (4 * D + 3 * F) * 4
    # TODO(synk): K-tiled reduction path (trailing "arbitrary" grid axis + f32
    # VMEM accumulator) for D/F so large that resident weights exceed the budget.
    assert w_bytes + b_bytes < budget, "weights too large to keep VMEM-resident"

    # Per-row VMEM: double-buffered x/out tiles + f32 intermediates in the body.
    per_row = 2 * (D + (D + F)) * 4 + 6 * max(D, 2 * F) * 4
    rows_fit = max(_MIN_TILE_ROWS, (budget - w_bytes - b_bytes) // per_row)
    tile_cap = int(min(max_tile_b or _MAX_TILE_ROWS, rows_fit, _MAX_TILE_ROWS))
    tile_cap = max(_MIN_TILE_ROWS, (tile_cap // _MIN_TILE_ROWS) * _MIN_TILE_ROWS)

    # Balanced tiles (<8 rows padding per tile); force >=2 tiles when B allows
    # so the "parallel" batch axis gives both v7x TensorCores work.
    num_tiles = _cdiv(B, tile_cap)
    if num_tiles == 1 and B > _MIN_TILE_ROWS:
        num_tiles = 2
    tile_b = _round_up(_cdiv(B, num_tiles), _MIN_TILE_ROWS)
    num_tiles = _cdiv(B, tile_b)
    b_pad = tile_b * num_tiles
    if b_pad != B:
        x = jnp.pad(x, ((0, b_pad - B), (0, 0)))

    # Scoped-VMEM request: tile working set (weights counted twice to cover the
    # double-buffered fallback), clamped to the physical budget.
    need = (2 * w_bytes + 2 * b_bytes
            + 2 * tile_b * (D + (D + F)) * 4
            + 8 * tile_b * max(D, 2 * F) * 4)
    vmem_limit = min(budget, max(need, 32 * 1024 * 1024))

    args = (x, prep["wg"], prep["bg"], prep["lnw"], prep["lnb"],
            prep["wf"], prep["bf"], prep["wmusg"], prep["bmusg"])
    call_kwargs = dict(tile_b=tile_b, num_tiles=num_tiles, b_pad=b_pad, D=D, F=F,
                       eps=eps, vmem_limit_bytes=vmem_limit)
    try:
        out = _build_call(single_buffer_weights=True, **call_kwargs)(*args)
    except Exception:
        # Fallback for JAX builds without BlockSpec(pipeline_mode=Buffered(1)).
        out = _build_call(single_buffer_weights=False, **call_kwargs)(*args)
    return out[:B]


def init_params(key, input_dim, fuzzy_dim):
    """Deterministic synthetic parameters matching FuzzyBlock.__init__ shapes."""
    ks = jax.random.split(key, 8)

    def linear(kw, kb, out_f, in_f):
        bound = 1.0 / jnp.sqrt(in_f)
        w = jax.random.uniform(kw, (out_f, in_f), jnp.float32, -bound, bound)
        b = jax.random.uniform(kb, (out_f,), jnp.float32, -bound, bound)
        return w, b

    wg, bg = linear(ks[0], ks[1], input_dim, input_dim)     # gaussian_layer
    wf, bf = linear(ks[2], ks[3], fuzzy_dim, input_dim)     # fuzzy_layer
    wmu, bmu = linear(ks[4], ks[5], fuzzy_dim, fuzzy_dim)   # mu_layer
    wsg, bsg = linear(ks[6], ks[7], fuzzy_dim, fuzzy_dim)   # sigma_layer
    lnw = jnp.ones((input_dim,), jnp.float32)               # LayerNorm weight
    lnb = jnp.zeros((input_dim,), jnp.float32)              # LayerNorm bias
    return dict(wg=wg, bg=bg, lnw=lnw, lnb=lnb,
                wf=wf, bf=bf, wmu=wmu, bmu=bmu, wsg=wsg, bsg=bsg)


def fuzzy_block_ref(x, p, eps=1e-5, matmul_dtype=jnp.float32):
    """Pure-JAX reference.  matmul_dtype=bfloat16 mirrors the kernel's MXU path."""
    def mm(a, w):   # w is torch-layout (out, in)
        return jnp.dot(a.astype(matmul_dtype), w.T.astype(matmul_dtype),
                       preferred_element_type=jnp.float32)
    g = mm(x, p["wg"]) + p["bg"]
    mean = g.mean(-1, keepdims=True)
    var = ((g - mean) ** 2).mean(-1, keepdims=True)
    xn = (g - mean) / jnp.sqrt(var + eps) * p["lnw"] + p["lnb"]
    ff = mm(xn, p["wf"]) + p["bf"]
    mu = mm(ff, p["wmu"]) + p["bmu"]
    sigma = jax.nn.softplus(mm(ff, p["wsg"]) + p["bsg"])
    mem = jnp.exp(-0.5 * ((ff - mu) / sigma) ** 2)
    return jnp.concatenate([xn, mem], axis=-1)


if __name__ == "__main__":
    # Small shapes consistent with the module: x is (batch, input_dim).
    batch, input_dim, fuzzy_dim = 24, 128, 128

    key = jax.random.PRNGKey(0)
    kx, kp = jax.random.split(key)
    x = jax.random.normal(kx, (batch, input_dim), jnp.float32)
    params = init_params(kp, input_dim, fuzzy_dim)

    # Weight transpose / mu-sigma fusion / bf16 cast done once per model,
    # not per forward call.
    prep = prepare_params(params)

    # Default path: balanced 2-tile grid (16 rows/tile) -> both v7x TCs get work.
    out = jax.block_until_ready(fuzzy_block(x, prep))
    # Multi-step grid path: tile_b=8 -> grid=(3,); exercises pipelining and the
    # VMEM-resident (single-buffered) weights across grid steps.
    out_tiled = jax.block_until_ready(fuzzy_block(x, prep, max_tile_b=8))

    assert out.shape == (batch, input_dim + fuzzy_dim)

    # Tight check vs. a reference that mirrors the bf16-operand / f32-acc path.
    ref_bf16 = fuzzy_block_ref(x, params, matmul_dtype=jnp.bfloat16)
    assert jnp.allclose(out, ref_bf16, atol=1e-3, rtol=1e-3), (
        float(jnp.max(jnp.abs(out - ref_bf16))))
    # Loose check vs. the exact f32 reference (bf16 operand rounding only).
    ref_f32 = fuzzy_block_ref(x, params, matmul_dtype=jnp.float32)
    assert jnp.allclose(out, ref_f32, atol=5e-2, rtol=5e-2), (
        float(jnp.max(jnp.abs(out - ref_f32))))
    # Tiling must not change results.
    assert jnp.allclose(out, out_tiled, atol=1e-6, rtol=1e-6)

    print("KERNEL_OK")
</pallas_src>

<mosaic_0001>
module attributes {stable_mosaic.version = 11 : i64} {
  func.func @fuzzy_block_kernel(%arg0: i32, %arg1: memref<16x128xf32, #tpu.memory_space<vmem>>, %arg2: memref<128x128xbf16, #tpu.memory_space<vmem>>, %arg3: memref<1x128xf32, #tpu.memory_space<vmem>>, %arg4: memref<1x128xf32, #tpu.memory_space<vmem>>, %arg5: memref<1x128xf32, #tpu.memory_space<vmem>>, %arg6: memref<128x128xbf16, #tpu.memory_space<vmem>>, %arg7: memref<1x128xf32, #tpu.memory_space<vmem>>, %arg8: memref<128x256xbf16, #tpu.memory_space<vmem>>, %arg9: memref<1x256xf32, #tpu.memory_space<vmem>>, %arg10: memref<16x256xf32, #tpu.memory_space<vmem>>) attributes {dimension_semantics = [#tpu.dimension_semantics<parallel>], iteration_bounds = array<i64: 2>, scalar_prefetch = 0 : i64, scratch_operands = 0 : i64, tpu.core_type = #tpu.core_type<tc>, window_params = [{transform_indices = @transform_0, window_bounds = array<i64: 16, 128>}, {pipeline_mode = #tpu.pipeline_mode<synchronous>, transform_indices = @transform_1, window_bounds = array<i64: 128, 128>}, {pipeline_mode = #tpu.pipeline_mode<synchronous>, transform_indices = @transform_2, window_bounds = array<i64: 1, 128>}, {pipeline_mode = #tpu.pipeline_mode<synchronous>, transform_indices = @transform_3, window_bounds = array<i64: 1, 128>}, {pipeline_mode = #tpu.pipeline_mode<synchronous>, transform_indices = @transform_4, window_bounds = array<i64: 1, 128>}, {pipeline_mode = #tpu.pipeline_mode<synchronous>, transform_indices = @transform_5, window_bounds = array<i64: 128, 128>}, {pipeline_mode = #tpu.pipeline_mode<synchronous>, transform_indices = @transform_6, window_bounds = array<i64: 1, 128>}, {pipeline_mode = #tpu.pipeline_mode<synchronous>, transform_indices = @transform_7, window_bounds = array<i64: 128, 256>}, {pipeline_mode = #tpu.pipeline_mode<synchronous>, transform_indices = @transform_8, window_bounds = array<i64: 1, 256>}, {transform_indices = @transform_9, window_bounds = array<i64: 16, 256>}]} {
    %c0 = arith.constant 0 : index
    %c0_0 = arith.constant 0 : index
    %0 = vector.load %arg1[%c0, %c0_0] : memref<16x128xf32, #tpu.memory_space<vmem>>, vector<16x128xf32>
    %1 = arith.truncf %0 : vector<16x128xf32> to vector<16x128xbf16>
    %c0_1 = arith.constant 0 : index
    %c0_2 = arith.constant 0 : index
    %2 = vector.load %arg2[%c0_1, %c0_2] : memref<128x128xbf16, #tpu.memory_space<vmem>>, vector<128x128xbf16>
    %cst = arith.constant dense<0.000000e+00> : vector<16x128xf32>
    %3 = tpu.matmul %1, %2, %cst {dimension_numbers = #tpu.dot_dimension_numbers<[1], [0], [0], [1], [0, 0, 1, 1], [], []>} : vector<16x128xbf16>, vector<128x128xbf16>, vector<16x128xf32> -> vector<16x128xf32>
    %c0_3 = arith.constant 0 : index
    %c0_4 = arith.constant 0 : index
    %4 = vector.load %arg3[%c0_3, %c0_4] : memref<1x128xf32, #tpu.memory_space<vmem>>, vector<1x128xf32>
    %5 = vector.broadcast %4 : vector<1x128xf32> to vector<16x128xf32>
    %6 = arith.addf %3, %5 : vector<16x128xf32>
    %cst_5 = arith.constant dense<0.000000e+00> : vector<16xf32>
    %7 = vector.multi_reduction <add>, %6, %cst_5 [1] : vector<16x128xf32> to vector<16xf32>
    %8 = vector.shape_cast %7 : vector<16xf32> to vector<16x1xf32>
    %cst_6 = arith.constant 1.280000e+02 : f32
    %9 = vector.broadcast %cst_6 : f32 to vector<16x1xf32>
    %10 = arith.divf %8, %9 : vector<16x1xf32>
    %11 = vector.broadcast %10 : vector<16x1xf32> to vector<16x128xf32>
    %12 = arith.subf %6, %11 : vector<16x128xf32>
    %13 = arith.mulf %12, %12 : vector<16x128xf32>
    %cst_7 = arith.constant dense<0.000000e+00> : vector<16xf32>
    %14 = vector.multi_reduction <add>, %13, %cst_7 [1] : vector<16x128xf32> to vector<16xf32>
    %15 = vector.shape_cast %14 : vector<16xf32> to vector<16x1xf32>
    %cst_8 = arith.constant 1.280000e+02 : f32
    %16 = vector.broadcast %cst_8 : f32 to vector<16x1xf32>
    %17 = arith.divf %15, %16 : vector<16x1xf32>
    %cst_9 = arith.constant 9.99999974E-6 : f32
    %18 = vector.broadcast %cst_9 : f32 to vector<16x1xf32>
    %19 = arith.addf %17, %18 : vector<16x1xf32>
    %20 = math.rsqrt %19 : vector<16x1xf32>
    %21 = vector.broadcast %20 : vector<16x1xf32> to vector<16x128xf32>
    %22 = arith.mulf %12, %21 : vector<16x128xf32>
    %c0_10 = arith.constant 0 : index
    %c0_11 = arith.constant 0 : index
    %23 = vector.load %arg4[%c0_10, %c0_11] : memref<1x128xf32, #tpu.memory_space<vmem>>, vector<1x128xf32>
    %24 = vector.broadcast %23 : vector<1x128xf32> to vector<16x128xf32>
    %25 = arith.mulf %22, %24 : vector<16x128xf32>
    %c0_12 = arith.constant 0 : index
    %c0_13 = arith.constant 0 : index
    %26 = vector.load %arg5[%c0_12, %c0_13] : memref<1x128xf32, #tpu.memory_space<vmem>>, vector<1x128xf32>
    %27 = vector.broadcast %26 : vector<1x128xf32> to vector<16x128xf32>
    %28 = arith.addf %25, %27 : vector<16x128xf32>
    %c0_14 = arith.constant 0 : index
    %c0_15 = arith.constant 0 : index
    %29 = vector.load %arg10[%c0_14, %c0_15] : memref<16x256xf32, #tpu.memory_space<vmem>>, vector<16x128xf32>
    tpu.vector_store %arg10[%c0_14, %c0_15], %28 {strides = array<i32>} : memref<16x256xf32, #tpu.memory_space<vmem>>, vector<16x128xf32>,
    %30 = arith.truncf %28 : vector<16x128xf32> to vector<16x128xbf16>
    %c0_16 = arith.constant 0 : index
    %c0_17 = arith.constant 0 : index
    %31 = vector.load %arg6[%c0_16, %c0_17] : memref<128x128xbf16, #tpu.memory_space<vmem>>, vector<128x128xbf16>
    %cst_18 = arith.constant dense<0.000000e+00> : vector<16x128xf32>
    %32 = tpu.matmul %30, %31, %cst_18 {dimension_numbers = #tpu.dot_dimension_numbers<[1], [0], [0], [1], [0, 0, 1, 1], [], []>} : vector<16x128xbf16>, vector<128x128xbf16>, vector<16x128xf32> -> vector<16x128xf32>
    %c0_19 = arith.constant 0 : index
    %c0_20 = arith.constant 0 : index
    %33 = vector.load %arg7[%c0_19, %c0_20] : memref<1x128xf32, #tpu.memory_space<vmem>>, vector<1x128xf32>
    %34 = vector.broadcast %33 : vector<1x128xf32> to vector<16x128xf32>
    %35 = arith.addf %32, %34 : vector<16x128xf32>
    %36 = arith.truncf %35 : vector<16x128xf32> to vector<16x128xbf16>
    %c0_21 = arith.constant 0 : index
    %c0_22 = arith.constant 0 : index
    %37 = vector.load %arg8[%c0_21, %c0_22] : memref<128x256xbf16, #tpu.memory_space<vmem>>, vector<128x256xbf16>
    %cst_23 = arith.constant dense<0.000000e+00> : vector<16x256xf32>
    %38 = tpu.matmul %36, %37, %cst_23 {dimension_numbers = #tpu.dot_dimension_numbers<[1], [0], [0], [1], [0, 0, 1, 1], [], []>} : vector<16x128xbf16>, vector<128x256xbf16>, vector<16x256xf32> -> vector<16x256xf32>
    %c0_24 = arith.constant 0 : index
    %c0_25 = arith.constant 0 : index
    %39 = vector.load %arg9[%c0_24, %c0_25] : memref<1x256xf32, #tpu.memory_space<vmem>>, vector<1x256xf32>
    %40 = vector.broadcast %39 : vector<1x256xf32> to vector<16x256xf32>
    %41 = arith.addf %38, %40 : vector<16x256xf32>
    %42 = vector.extract_strided_slice %41 {offsets = [0, 128], sizes = [16, 128], strides = [1, 1]} : vector<16x256xf32> to vector<16x128xf32>
    %cst_26 = arith.constant 0.000000e+00 : f32
    %43 = vector.broadcast %cst_26 : f32 to vector<16x128xf32>
    %44 = arith.maximumf %42, %43 : vector<16x128xf32>
    %45 = math.absf %42 : vector<16x128xf32>
    %cst_27 = arith.constant 0.000000e+00 : f32
    %46 = vector.broadcast %cst_27 : f32 to vector<16x128xf32>
    %47 = arith.subf %46, %45 : vector<16x128xf32>
    %48 = math.exp %47 : vector<16x128xf32>
    %49 = math.log1p %48 : vector<16x128xf32>
    %50 = arith.addf %44, %49 : vector<16x128xf32>
    %51 = vector.extract_strided_slice %41 {offsets = [0, 0], sizes = [16, 128], strides = [1, 1]} : vector<16x256xf32> to vector<16x128xf32>
    %52 = arith.subf %35, %51 : vector<16x128xf32>
    %53 = arith.divf %52, %50 : vector<16x128xf32>
    %cst_28 = arith.constant -5.000000e-01 : f32
    %54 = vector.broadcast %cst_28 : f32 to vector<16x128xf32>
    %55 = arith.mulf %54, %53 : vector<16x128xf32>
    %56 = arith.mulf %55, %53 : vector<16x128xf32>
    %57 = math.exp %56 : vector<16x128xf32>
    %c0_29 = arith.constant 0 : index
    %c128 = arith.constant 128 : index
    %58 = vector.load %arg10[%c0_29, %c128] : memref<16x256xf32, #tpu.memory_space<vmem>>, vector<16x128xf32>
    tpu.vector_store %arg10[%c0_29, %c128], %57 {strides = array<i32>} : memref<16x256xf32, #tpu.memory_space<vmem>>, vector<16x128xf32>,
    return
  }
  func.func @transform_0(%arg0: i32) -> (i32, i32) {
    %c0_i32 = arith.constant 0 : i32
    %c0_i32_0 = arith.constant 0 : i32
    return %arg0, %c0_i32 : i32, i32
  }
  func.func @transform_1(%arg0: i32) -> (i32, i32) {
    %c0_i32 = arith.constant 0 : i32
    %c0_i32_0 = arith.constant 0 : i32
    %c0_i32_1 = arith.constant 0 : i32
    return %c0_i32, %c0_i32_0 : i32, i32
  }
  func.func @transform_2(%arg0: i32) -> (i32, i32) {
    %c0_i32 = arith.constant 0 : i32
    %c0_i32_0 = arith.constant 0 : i32
    %c0_i32_1 = arith.constant 0 : i32
    return %c0_i32, %c0_i32_0 : i32, i32
  }
  func.func @transform_3(%arg0: i32) -> (i32, i32) {
    %c0_i32 = arith.constant 0 : i32
    %c0_i32_0 = arith.constant 0 : i32
    %c0_i32_1 = arith.constant 0 : i32
    return %c0_i32, %c0_i32_0 : i32, i32
  }
  func.func @transform_4(%arg0: i32) -> (i32, i32) {
    %c0_i32 = arith.constant 0 : i32
    %c0_i32_0 = arith.constant 0 : i32
    %c0_i32_1 = arith.constant 0 : i32
    return %c0_i32, %c0_i32_0 : i32, i32
  }
  func.func @transform_5(%arg0: i32) -> (i32, i32) {
    %c0_i32 = arith.constant 0 : i32
    %c0_i32_0 = arith.constant 0 : i32
    %c0_i32_1 = arith.constant 0 : i32
    return %c0_i32, %c0_i32_0 : i32, i32
  }
  func.func @transform_6(%arg0: i32) -> (i32, i32) {
    %c0_i32 = arith.constant 0 : i32
    %c0_i32_0 = arith.constant 0 : i32
    %c0_i32_1 = arith.constant 0 : i32
    return %c0_i32, %c0_i32_0 : i32, i32
  }
  func.func @transform_7(%arg0: i32) -> (i32, i32) {
    %c0_i32 = arith.constant 0 : i32
    %c0_i32_0 = arith.constant 0 : i32
    %c0_i32_1 = arith.constant 0 : i32
    return %c0_i32, %c0_i32_0 : i32, i32
  }
  func.func @transform_8(%arg0: i32) -> (i32, i32) {
    %c0_i32 = arith.constant 0 : i32
    %c0_i32_0 = arith.constant 0 : i32
    %c0_i32_1 = arith.constant 0 : i32
    return %c0_i32, %c0_i32_0 : i32, i32
  }
  func.func @transform_9(%arg0: i32) -> (i32, i32) {
    %c0_i32 = arith.constant 0 : i32
    %c0_i32_0 = arith.constant 0 : i32
    return %arg0, %c0_i32 : i32, i32
  }
}

module attributes {stable_mosaic.version = 11 : i64} {
  func.func @fuzzy_block_kernel(%arg0: i32, %arg1: memref<16x128xf32, #tpu.memory_space<vmem>>, %arg2: memref<128x128xbf16, #tpu.memory_space<vmem>>, %arg3: memref<1x128xf32, #tpu.memory_space<vmem>>, %arg4: memref<1x128xf32, #tpu.memory_space<vmem>>, %arg5: memref<1x128xf32, #tpu.memory_space<vmem>>, %arg6: memref<128x128xbf16, #tpu.memory_space<vmem>>, %arg7: memref<1x128xf32, #tpu.memory_space<vmem>>, %arg8: memref<128x256xbf16, #tpu.memory_space<vmem>>, %arg9: memref<1x256xf32, #tpu.memory_space<vmem>>, %arg10: memref<16x256xf32, #tpu.memory_space<vmem>>) attributes {dimension_semantics = [#tpu.dimension_semantics<parallel>], iteration_bounds = array<i64: 2>, scalar_prefetch = 0 : i64, scratch_operands = 0 : i64, tpu.core_type = #tpu.core_type<tc>, window_params = [{transform_indices = @transform_0, window_bounds = array<i64: 16, 128>}, {pipeline_mode = #tpu.pipeline_mode<synchronous>, transform_indices = @transform_1, window_bounds = array<i64: 128, 128>}, {pipeline_mode = #tpu.pipeline_mode<synchronous>, transform_indices = @transform_2, window_bounds = array<i64: 1, 128>}, {pipeline_mode = #tpu.pipeline_mode<synchronous>, transform_indices = @transform_3, window_bounds = array<i64: 1, 128>}, {pipeline_mode = #tpu.pipeline_mode<synchronous>, transform_indices = @transform_4, window_bounds = array<i64: 1, 128>}, {pipeline_mode = #tpu.pipeline_mode<synchronous>, transform_indices = @transform_5, window_bounds = array<i64: 128, 128>}, {pipeline_mode = #tpu.pipeline_mode<synchronous>, transform_indices = @transform_6, window_bounds = array<i64: 1, 128>}, {pipeline_mode = #tpu.pipeline_mode<synchronous>, transform_indices = @transform_7, window_bounds = array<i64: 128, 256>}, {pipeline_mode = #tpu.pipeline_mode<synchronous>, transform_indices = @transform_8, window_bounds = array<i64: 1, 256>}, {transform_indices = @transform_9, window_bounds = array<i64: 16, 256>}]} {
    %c0 = arith.constant 0 : index
    %c0_0 = arith.constant 0 : index
    %0 = vector.load %arg1[%c0, %c0_0] : memref<16x128xf32, #tpu.memory_space<vmem>>, vector<16x128xf32>
    %1 = arith.truncf %0 : vector<16x128xf32> to vector<16x128xbf16>
    %c0_1 = arith.constant 0 : index
    %c0_2 = arith.constant 0 : index
    %2 = vector.load %arg2[%c0_1, %c0_2] : memref<128x128xbf16, #tpu.memory_space<vmem>>, vector<128x128xbf16>
    %cst = arith.constant dense<0.000000e+00> : vector<16x128xf32>
    %3 = tpu.matmul %1, %2, %cst {dimension_numbers = #tpu.dot_dimension_numbers<[1], [0], [0], [1], [0, 0, 1, 1], [], []>} : vector<16x128xbf16>, vector<128x128xbf16>, vector<16x128xf32> -> vector<16x128xf32>
    %c0_3 = arith.constant 0 : index
    %c0_4 = arith.constant 0 : index
    %4 = vector.load %arg3[%c0_3, %c0_4] : memref<1x128xf32, #tpu.memory_space<vmem>>, vector<1x128xf32>
    %5 = vector.broadcast %4 : vector<1x128xf32> to vector<16x128xf32>
    %6 = arith.addf %3, %5 : vector<16x128xf32>
    %cst_5 = arith.constant dense<0.000000e+00> : vector<16xf32>
    %7 = vector.multi_reduction <add>, %6, %cst_5 [1] : vector<16x128xf32> to vector<16xf32>
    %8 = vector.shape_cast %7 : vector<16xf32> to vector<16x1xf32>
    %cst_6 = arith.constant 1.280000e+02 : f32
    %9 = vector.broadcast %cst_6 : f32 to vector<16x1xf32>
    %10 = arith.divf %8, %9 : vector<16x1xf32>
    %11 = vector.broadcast %10 : vector<16x1xf32> to vector<16x128xf32>
    %12 = arith.subf %6, %11 : vector<16x128xf32>
    %13 = arith.mulf %12, %12 : vector<16x128xf32>
    %cst_7 = arith.constant dense<0.000000e+00> : vector<16xf32>
    %14 = vector.multi_reduction <add>, %13, %cst_7 [1] : vector<16x128xf32> to vector<16xf32>
    %15 = vector.shape_cast %14 : vector<16xf32> to vector<16x1xf32>
    %cst_8 = arith.constant 1.280000e+02 : f32
    %16 = vector.broadcast %cst_8 : f32 to vector<16x1xf32>
    %17 = arith.divf %15, %16 : vector<16x1xf32>
    %cst_9 = arith.constant 9.99999974E-6 : f32
    %18 = vector.broadcast %cst_9 : f32 to vector<16x1xf32>
    %19 = arith.addf %17, %18 : vector<16x1xf32>
    %20 = math.rsqrt %19 : vector<16x1xf32>
    %21 = vector.broadcast %20 : vector<16x1xf32> to vector<16x128xf32>
    %22 = arith.mulf %12, %21 : vector<16x128xf32>
    %c0_10 = arith.constant 0 : index
    %c0_11 = arith.constant 0 : index
    %23 = vector.load %arg4[%c0_10, %c0_11] : memref<1x128xf32, #tpu.memory_space<vmem>>, vector<1x128xf32>
    %24 = vector.broadcast %23 : vector<1x128xf32> to vector<16x128xf32>
    %25 = arith.mulf %22, %24 : vector<16x128xf32>
    %c0_12 = arith.constant 0 : index
    %c0_13 = arith.constant 0 : index
    %26 = vector.load %arg5[%c0_12, %c0_13] : memref<1x128xf32, #tpu.memory_space<vmem>>, vector<1x128xf32>
    %27 = vector.broadcast %26 : vector<1x128xf32> to vector<16x128xf32>
    %28 = arith.addf %25, %27 : vector<16x128xf32>
    %c0_14 = arith.constant 0 : index
    %c0_15 = arith.constant 0 : index
    %29 = vector.load %arg10[%c0_14, %c0_15] : memref<16x256xf32, #tpu.memory_space<vmem>>, vector<16x128xf32>
    tpu.vector_store %arg10[%c0_14, %c0_15], %28 {strides = array<i32>} : memref<16x256xf32, #tpu.memory_space<vmem>>, vector<16x128xf32>,
    %30 = arith.truncf %28 : vector<16x128xf32> to vector<16x128xbf16>
    %c0_16 = arith.constant 0 : index
    %c0_17 = arith.constant 0 : index
    %31 = vector.load %arg6[%c0_16, %c0_17] : memref<128x128xbf16, #tpu.memory_space<vmem>>, vector<128x128xbf16>
    %cst_18 = arith.constant dense<0.000000e+00> : vector<16x128xf32>
    %32 = tpu.matmul %30, %31, %cst_18 {dimension_numbers = #tpu.dot_dimension_numbers<[1], [0], [0], [1], [0, 0, 1, 1], [], []>} : vector<16x128xbf16>, vector<128x128xbf16>, vector<16x128xf32> -> vector<16x128xf32>
    %c0_19 = arith.constant 0 : index
    %c0_20 = arith.constant 0 : index
    %33 = vector.load %arg7[%c0_19, %c0_20] : memref<1x128xf32, #tpu.memory_space<vmem>>, vector<1x128xf32>
    %34 = vector.broadcast %33 : vector<1x128xf32> to vector<16x128xf32>
    %35 = arith.addf %32, %34 : vector<16x128xf32>
    %36 = arith.truncf %35 : vector<16x128xf32> to vector<16x128xbf16>
    %c0_21 = arith.constant 0 : index
    %c0_22 = arith.constant 0 : index
    %37 = vector.load %arg8[%c0_21, %c0_22] : memref<128x256xbf16, #tpu.memory_space<vmem>>, vector<128x256xbf16>
    %cst_23 = arith.constant dense<0.000000e+00> : vector<16x256xf32>
    %38 = tpu.matmul %36, %37, %cst_23 {dimension_numbers = #tpu.dot_dimension_numbers<[1], [0], [0], [1], [0, 0, 1, 1], [], []>} : vector<16x128xbf16>, vector<128x256xbf16>, vector<16x256xf32> -> vector<16x256xf32>
    %c0_24 = arith.constant 0 : index
    %c0_25 = arith.constant 0 : index
    %39 = vector.load %arg9[%c0_24, %c0_25] : memref<1x256xf32, #tpu.memory_space<vmem>>, vector<1x256xf32>
    %40 = vector.broadcast %39 : vector<1x256xf32> to vector<16x256xf32>
    %41 = arith.addf %38, %40 : vector<16x256xf32>
    %42 = vector.extract_strided_slice %41 {offsets = [0, 128], sizes = [16, 128], strides = [1, 1]} : vector<16x256xf32> to vector<16x128xf32>
    %cst_26 = arith.constant 0.000000e+00 : f32
    %43 = vector.broadcast %cst_26 : f32 to vector<16x128xf32>
    %44 = arith.maximumf %42, %43 : vector<16x128xf32>
    %45 = math.absf %42 : vector<16x128xf32>
    %cst_27 = arith.constant 0.000000e+00 : f32
    %46 = vector.broadcast %cst_27 : f32 to vector<16x128xf32>
    %47 = arith.subf %46, %45 : vector<16x128xf32>
    %48 = math.exp %47 : vector<16x128xf32>
    %49 = math.log1p %48 : vector<16x128xf32>
    %50 = arith.addf %44, %49 : vector<16x128xf32>
    %51 = vector.extract_strided_slice %41 {offsets = [0, 0], sizes = [16, 128], strides = [1, 1]} : vector<16x256xf32> to vector<16x128xf32>
    %52 = arith.subf %35, %51 : vector<16x128xf32>
    %53 = arith.divf %52, %50 : vector<16x128xf32>
    %cst_28 = arith.constant -5.000000e-01 : f32
    %54 = vector.broadcast %cst_28 : f32 to vector<16x128xf32>
    %55 = arith.mulf %54, %53 : vector<16x128xf32>
    %56 = arith.mulf %55, %53 : vector<16x128xf32>
    %57 = math.exp %56 : vector<16x128xf32>
    %c0_29 = arith.constant 0 : index
    %c128 = arith.constant 128 : index
    %58 = vector.load %arg10[%c0_29, %c128] : memref<16x256xf32, #tpu.memory_space<vmem>>, vector<16x128xf32>
    tpu.vector_store %arg10[%c0_29, %c128], %57 {strides = array<i32>} : memref<16x256xf32, #tpu.memory_space<vmem>>, vector<16x128xf32>,
    return
  }
  func.func @transform_0(%arg0: i32) -> (i32, i32) {
    %c0_i32 = arith.constant 0 : i32
    %c0_i32_0 = arith.constant 0 : i32
    return %arg0, %c0_i32 : i32, i32
  }
  func.func @transform_1(%arg0: i32) -> (i32, i32) {
    %c0_i32 = arith.constant 0 : i32
    %c0_i32_0 = arith.constant 0 : i32
    %c0_i32_1 = arith.constant 0 : i32
    return %c0_i32, %c0_i32_0 : i32, i32
  }
  func.func @transform_2(%arg0: i32) -> (i32, i32) {
    %c0_i32 = arith.constant 0 : i32
    %c0_i32_0 = arith.constant 0 : i32
    %c0_i32_1 = arith.constant 0 : i32
    return %c0_i32, %c0_i32_0 : i32, i32
  }
  func.func @transform_3(%arg0: i32) -> (i32, i32) {
    %c0_i32 = arith.constant 0 : i32
    %c0_i32_0 = arith.constant 0 : i32
    %c0_i32_1 = arith.constant 0 : i32
    return %c0_i32, %c0_i32_0 : i32, i32
  }
  func.func @transform_4(%arg0: i32) -> (i32, i32) {
    %c0_i32 = arith.constant 0 : i32
    %c0_i32_0 = arith.constant 0 : i32
    %c0_i32_1 = arith.constant 0 : i32
    return %c0_i32, %c0_i32_0 : i32, i32
  }
  func.func @transform_5(%arg0: i32) -> (i32, i32) {
    %c0_i32 = arith.constant 0 : i32
    %c0_i32_0 = arith.constant 0 : i32
    %c0_i32_1 = arith.constant 0 : i32
    return %c0_i32, %c0_i32_0 : i32, i32
  }
  func.func @transform_6(%arg0: i32) -> (i32, i32) {
    %c0_i32 = arith.constant 0 : i32
    %c0_i32_0 = arith.constant 0 : i32
    %c0_i32_1 = arith.constant 0 : i32
    return %c0_i32, %c0_i32_0 : i32, i32
  }
  func.func @transform_7(%arg0: i32) -> (i32, i32) {
    %c0_i32 = arith.constant 0 : i32
    %c0_i32_0 = arith.constant 0 : i32
    %c0_i32_1 = arith.constant 0 : i32
    return %c0_i32, %c0_i32_0 : i32, i32
  }
  func.func @transform_8(%arg0: i32) -> (i32, i32) {
    %c0_i32 = arith.constant 0 : i32
    %c0_i32_0 = arith.constant 0 : i32
    %c0_i32_1 = arith.constant 0 : i32
    return %c0_i32, %c0_i32_0 : i32, i32
  }
  func.func @transform_9(%arg0: i32) -> (i32, i32) {
    %c0_i32 = arith.constant 0 : i32
    %c0_i32_0 = arith.constant 0 : i32
    return %arg0, %c0_i32 : i32, i32
  }
}

</mosaic_0001>

<llo_original>
// kernel: tpu_custom_call.1
$region0: #{tpu_custom_call.1}
  #allocation0 [shape = 'u32[]', space=smem, size = 0x4, offset = 0x4, fixed_abs, tag = 'smem constant byte address 0x4 - core index']
  #allocation1 [shape = 'u32[72,128]{1,0:T(1,128)}', space=vmem, size = 0x9000, scoped, tag = 'internal scratch']
  %s0 = inlined_call_operand.hbm [shape: f32[32,128], index: 0, kind: input, shape index: {}]
  %s1 = inlined_call_operand.hbm [shape: bf16[128,128], index: 1, kind: input, shape index: {}]
  %s2 = inlined_call_operand.vmem [shape: f32[1,128], index: 2, kind: input, shape index: {}]
  %s3 = inlined_call_operand.hbm [shape: f32[1,128], index: 3, kind: input, shape index: {}]
  %s4 = inlined_call_operand.hbm [shape: f32[1,128], index: 4, kind: input, shape index: {}]
  %s5 = inlined_call_operand.hbm [shape: bf16[128,128], index: 5, kind: input, shape index: {}]
  %s6 = inlined_call_operand.vmem [shape: f32[1,128], index: 6, kind: input, shape index: {}]
  %s7 = inlined_call_operand.hbm [shape: bf16[128,256], index: 7, kind: input, shape index: {}]
  %s8 = inlined_call_operand.vmem [shape: f32[1,256], index: 8, kind: input, shape index: {}]
  %s9 = inlined_call_operand.hbm [shape: f32[32,256], index: 9, kind: output, shape index: {}]
  %s10 = sld [smem:[#allocation0]]
  $region93: #{tpu_custom_call.1} parent=0
    _
  %s12 = ssub.s32 1, %s10
  %s13 = scalar_select 0, %s12, %s10
  $region1: #{tpu_custom_call.1} parent=0
    #allocation2 [shape = 'u8[16384]{0}', space=vmem, size = 0x4000, scoped, tag = 'input window, operand 0']
    #allocation3 [shape = 's32[2]{0}', space=sflag, size = 0x8, scoped, tag = 'scoped memory for tpu_custom_call.1']
    #allocation4 [shape = 's32[2]{0}', space=sflag, size = 0x8, scoped, tag = 'scoped memory for tpu_custom_call.1']
    #allocation5 [shape = 'u8[32768]{0}', space=vmem, size = 0x8000, scoped, tag = 'input window, operand 1, single buffered']
    #allocation6 [shape = 's32[1]{0}', space=sflag, size = 0x4, scoped, tag = 'scoped memory for tpu_custom_call.1']
    #allocation7 [shape = 'u8[512]{0}', space=vmem, size = 0x400, scoped, tag = 'input window, operand 3, single buffered']
    #allocation8 [shape = 'u8[512]{0}', space=vmem, size = 0x400, scoped, tag = 'input window, operand 4, single buffered']
    #allocation9 [shape = 's32[1]{0}', space=sflag, size = 0x4, scoped, tag = 'scoped memory for tpu_custom_call.1']
    #allocation10 [shape = 'u8[32768]{0}', space=vmem, size = 0x8000, scoped, tag = 'input window, operand 5, single buffered']
    #allocation11 [shape = 'u8[65536]{0}', space=vmem, size = 0x10000, scoped, tag = 'input window, operand 7, single buffered']
    #allocation12 [shape = 's32[1]{0}', space=sflag, size = 0x4, scoped, tag = 'scoped memory for tpu_custom_call.1']
    #allocation13 [shape = 'u8[32768]{0}', space=vmem, size = 0x8000, scoped, tag = 'output window, operand 0']
    %14 = vsyncpa [#allocation3], 0
    %s15 = scalar_lea.sflag [#allocation3], 1
    %16 = vsyncpa %s15, 0
    %17 = vsyncpa [#allocation6], 0
    %18 = vsyncpa [#allocation9], 0
    %19 = vsyncpa [#allocation12], 0
    %20 = vsyncpa [#allocation4], 0
    %s21 = scalar_lea.sflag [#allocation4], 1
    %22 = vsyncpa %s21, 0
    loop: start=0, step=1, limit=4
    $region2: #{tpu_custom_call.1} parent=1 // loop_pre_header
      _
    $region3: #{tpu_custom_call.1} parent=1 // loop_header
      %s24 = sphi 0, %s28
      %p25 = scmp.ge.s32.totalorder %s24, 4
      %s34 = sphi 0, %s36
      %s37 = sphi 0, %s34
      %s38 = sphi 0, %s37
      %s54 = sphi 0, %s38
      %s58 = sphi 0, %s58
      %s60 = sphi 0, %s58
      %s61 = sphi 0, %s60
      %s75 = sphi 0, %s61
      %s79 = sphi 0, %s79
      %s81 = sphi 0, %s79
      %s82 = sphi 0, %s81
      %s96 = sphi 0, %s82
      %s100 = sphi 0, %s100
      %s102 = sphi 0, %s100
      %s103 = sphi 0, %s102
      %s117 = sphi 0, %s103
      %s121 = sphi 0, %s121
      %s123 = sphi 0, %s121
      %s124 = sphi 0, %s123
      %s138 = sphi 0, %s124
      %s142 = sphi 0, %s142
      %s144 = sphi 0, %s142
      %s145 = sphi 0, %s144
      %s159 = sphi 0, %s145
      %s163 = sphi 0, %s163
      %s165 = sphi 0, %s163
      %s166 = sphi 0, %s165
      %s180 = sphi 0, %s166
      %s184 = sphi 0, %s184
      %s186 = sphi 0, %s184
      %s187 = sphi 0, %s186
      %s201 = sphi 0, %s187
      %s205 = sphi 0, %s205
      %s207 = sphi 0, %s205
      %s208 = sphi 0, %s207
      %s222 = sphi 0, %s208
      %s228 = sphi 0, %s230
      %s231 = sphi 0, %s228
      %s232 = sphi 0, %s231
      %s248 = sphi 0, %s232
    $region4: #{tpu_custom_call.1} parent=1 // loop_header_branch
      %27 = sbr.rel (%p25) target = $region8
    $region5: #{tpu_custom_call.1} parent=1 // loop_body
      %s29 = ssub.s32 %s24, 1
      %s30 = ssub.s32 %s24, 2
      %s31 = sadd.s32 %s24, 1
      %s32 = ssub.s32 %s24, %s31
      %p33 = scmp.eq.s32.totalorder %s32, 0
      %s35 = sadd.s32 %s34, 1
      %s36 = scalar_select %p33, %s34, %s35
      %p39 = pneg %p33
      %p40 = scmp.eq.s32.totalorder %s24, 1
      %p41 = por %p39, %p40
      %p42 = scmp.ne.s32.totalorder %s34, %s37
      %p43 = scmp.eq.s32.totalorder %s24, 0
      %p44 = por %p42, %p43
      %p45 = scmp.ne.s32.totalorder %s34, %s37
      %p46 = scmp.eq.s32.totalorder %s29, 1
      %p47 = por %p45, %p46
      %p48 = scmp.ne.s32.totalorder %s37, %s38
      %p49 = scmp.eq.s32.totalorder %s29, 0
      %p50 = por %p48, %p49
      %p51 = scmp.ne.s32.totalorder %s37, %s38
      %p52 = scmp.eq.s32.totalorder %s30, 1
      %p53 = por %p51, %p52
      %p55 = scmp.ne.s32.totalorder %s38, %s54
      %p56 = scmp.eq.s32.totalorder %s30, 0
      %p57 = por %p55, %p56
      %s59 = sadd.s32 %s58, 1
      %p62 = scmp.eq.s32.totalorder %s24, 1
      %p63 = scmp.ne.s32.totalorder %s58, %s60
      %p64 = scmp.eq.s32.totalorder %s24, 0
      %p65 = por %p63, %p64
      %p66 = scmp.ne.s32.totalorder %s58, %s60
      %p67 = scmp.eq.s32.totalorder %s29, 1
      %p68 = por %p66, %p67
      %p69 = scmp.ne.s32.totalorder %s60, %s61
      %p70 = scmp.eq.s32.totalorder %s29, 0
      %p71 = por %p69, %p70
      %p72 = scmp.ne.s32.totalorder %s60, %s61
      %p73 = scmp.eq.s32.totalorder %s30, 1
      %p74 = por %p72, %p73
      %p76 = scmp.ne.s32.totalorder %s61, %s75
      %p77 = scmp.eq.s32.totalorder %s30, 0
      %p78 = por %p76, %p77
      %s80 = sadd.s32 %s79, 1
      %p83 = scmp.eq.s32.totalorder %s24, 1
      %p84 = scmp.ne.s32.totalorder %s79, %s81
      %p85 = scmp.eq.s32.totalorder %s24, 0
      %p86 = por %p84, %p85
      %p87 = scmp.ne.s32.totalorder %s79, %s81
      %p88 = scmp.eq.s32.totalorder %s29, 1
      %p89 = por %p87, %p88
      %p90 = scmp.ne.s32.totalorder %s81, %s82
      %p91 = scmp.eq.s32.totalorder %s29, 0
      %p92 = por %p90, %p91
      %p93 = scmp.ne.s32.totalorder %s81, %s82
      %p94 = scmp.eq.s32.totalorder %s30, 1
      %p95 = por %p93, %p94
      %p97 = scmp.ne.s32.totalorder %s82, %s96
      %p98 = scmp.eq.s32.totalorder %s30, 0
      %p99 = por %p97, %p98
      %s101 = sadd.s32 %s100, 1
      %p104 = scmp.eq.s32.totalorder %s24, 1
      %p105 = scmp.ne.s32.totalorder %s100, %s102
      %p106 = scmp.eq.s32.totalorder %s24, 0
      %p107 = por %p105, %p106
      %p108 = scmp.ne.s32.totalorder %s100, %s102
      %p109 = scmp.eq.s32.totalorder %s29, 1
      %p110 = por %p108, %p109
      %p111 = scmp.ne.s32.totalorder %s102, %s103
      %p112 = scmp.eq.s32.totalorder %s29, 0
      %p113 = por %p111, %p112
      %p114 = scmp.ne.s32.totalorder %s102, %s103
      %p115 = scmp.eq.s32.totalorder %s30, 1
      %p116 = por %p114, %p115
      %p118 = scmp.ne.s32.totalorder %s103, %s117
      %p119 = scmp.eq.s32.totalorder %s30, 0
      %p120 = por %p118, %p119
      %s122 = sadd.s32 %s121, 1
      %p125 = scmp.eq.s32.totalorder %s24, 1
      %p126 = scmp.ne.s32.totalorder %s121, %s123
      %p127 = scmp.eq.s32.totalorder %s24, 0
      %p128 = por %p126, %p127
      %p129 = scmp.ne.s32.totalorder %s121, %s123
      %p130 = scmp.eq.s32.totalorder %s29, 1
      %p131 = por %p129, %p130
      %p132 = scmp.ne.s32.totalorder %s123, %s124
      %p133 = scmp.eq.s32.totalorder %s29, 0
      %p134 = por %p132, %p133
      %p135 = scmp.ne.s32.totalorder %s123, %s124
      %p136 = scmp.eq.s32.totalorder %s30, 1
      %p137 = por %p135, %p136
      %p139 = scmp.ne.s32.totalorder %s124, %s138
      %p140 = scmp.eq.s32.totalorder %s30, 0
      %p141 = por %p139, %p140
      %s143 = sadd.s32 %s142, 1
      %p146 = scmp.eq.s32.totalorder %s24, 1
      %p147 = scmp.ne.s32.totalorder %s142, %s144
      %p148 = scmp.eq.s32.totalorder %s24, 0
      %p149 = por %p147, %p148
      %p150 = scmp.ne.s32.totalorder %s142, %s144
      %p151 = scmp.eq.s32.totalorder %s29, 1
      %p152 = por %p150, %p151
      %p153 = scmp.ne.s32.totalorder %s144, %s145
      %p154 = scmp.eq.s32.totalorder %s29, 0
      %p155 = por %p153, %p154
      %p156 = scmp.ne.s32.totalorder %s144, %s145
      %p157 = scmp.eq.s32.totalorder %s30, 1
      %p158 = por %p156, %p157
      %p160 = scmp.ne.s32.totalorder %s145, %s159
      %p161 = scmp.eq.s32.totalorder %s30, 0
      %p162 = por %p160, %p161
      %s164 = sadd.s32 %s163, 1
      %p167 = scmp.eq.s32.totalorder %s24, 1
      %p168 = scmp.ne.s32.totalorder %s163, %s165
      %p169 = scmp.eq.s32.totalorder %s24, 0
      %p170 = por %p168, %p169
      %p171 = scmp.ne.s32.totalorder %s163, %s165
      %p172 = scmp.eq.s32.totalorder %s29, 1
      %p173 = por %p171, %p172
      %p174 = scmp.ne.s32.totalorder %s165, %s166
      %p175 = scmp.eq.s32.totalorder %s29, 0
      %p176 = por %p174, %p175
      %p177 = scmp.ne.s32.totalorder %s165, %s166
      %p178 = scmp.eq.s32.totalorder %s30, 1
      %p179 = por %p177, %p178
      %p181 = scmp.ne.s32.totalorder %s166, %s180
      %p182 = scmp.eq.s32.totalorder %s30, 0
      %p183 = por %p181, %p182
      %s185 = sadd.s32 %s184, 1
      %p188 = scmp.eq.s32.totalorder %s24, 1
      %p189 = scmp.ne.s32.totalorder %s184, %s186
      %p190 = scmp.eq.s32.totalorder %s24, 0
      %p191 = por %p189, %p190
      %p192 = scmp.ne.s32.totalorder %s184, %s186
      %p193 = scmp.eq.s32.totalorder %s29, 1
      %p194 = por %p192, %p193
      %p195 = scmp.ne.s32.totalorder %s186, %s187
      %p196 = scmp.eq.s32.totalorder %s29, 0
      %p197 = por %p195, %p196
      %p198 = scmp.ne.s32.totalorder %s186, %s187
      %p199 = scmp.eq.s32.totalorder %s30, 1
      %p200 = por %p198, %p199
      %p202 = scmp.ne.s32.totalorder %s187, %s201
      %p203 = scmp.eq.s32.totalorder %s30, 0
      %p204 = por %p202, %p203
      %s206 = sadd.s32 %s205, 1
      %p209 = scmp.eq.s32.totalorder %s24, 1
      %p210 = scmp.ne.s32.totalorder %s205, %s207
      %p211 = scmp.eq.s32.totalorder %s24, 0
      %p212 = por %p210, %p211
      %p213 = scmp.ne.s32.totalorder %s205, %s207
      %p214 = scmp.eq.s32.totalorder %s29, 1
      %p215 = por %p213, %p214
      %p216 = scmp.ne.s32.totalorder %s207, %s208
      %p217 = scmp.eq.s32.totalorder %s29, 0
      %p218 = por %p216, %p217
      %p219 = scmp.ne.s32.totalorder %s207, %s208
      %p220 = scmp.eq.s32.totalorder %s30, 1
      %p221 = por %p219, %p220
      %p223 = scmp.ne.s32.totalorder %s208, %s222
      %p224 = scmp.eq.s32.totalorder %s30, 0
      %p225 = por %p223, %p224
      %s226 = ssub.s32 %s24, %s31
      %p227 = scmp.eq.s32.totalorder %s226, 0
      %s229 = sadd.s32 %s228, 1
      %s230 = scalar_select %p227, %s228, %s229
      %p233 = pneg %p227
      %p234 = scmp.eq.s32.totalorder %s24, 1
      %p235 = por %p233, %p234
      %p236 = scmp.ne.s32.totalorder %s228, %s231
      %p237 = scmp.eq.s32.totalorder %s24, 0
      %p238 = por %p236, %p237
      %p239 = scmp.ne.s32.totalorder %s228, %s231
      %p240 = scmp.eq.s32.totalorder %s29, 1
      %p241 = por %p239, %p240
      %p242 = scmp.ne.s32.totalorder %s231, %s232
      %p243 = scmp.eq.s32.totalorder %s29, 0
      %p244 = por %p242, %p243
      %p245 = scmp.ne.s32.totalorder %s231, %s232
      %p246 = scmp.eq.s32.totalorder %s30, 1
      %p247 = por %p245, %p246
      %p249 = scmp.ne.s32.totalorder %s232, %s248
      %p250 = scmp.eq.s32.totalorder %s30, 0
      %p251 = por %p249, %p250
      %p252 = scmp.le.s32.totalorder 1, %s24
      %p253 = scmp.lt.s32.totalorder %s24, 3
      %p254 = pnand %p252, %p253
      %p255 = pneg %p254
      // Predicated region
      $region9: #{tpu_custom_call.1} parent=5 // pred_check
        _
      $region10: #{tpu_custom_call.1} parent=5 // pred_check_branch
        %257 = sbr.rel (%p254) target = $region12
      $region11: #{tpu_custom_call.1} parent=5 // pred_region
        %s258 = ssub.s32 %s24, 1
        // Predicated region
        $region13: #{tpu_custom_call.1} parent=11 // pred_check
          %p259 = pneg %p71
        $region14: #{tpu_custom_call.1} parent=11 // pred_check_branch
          %261 = sbr.rel (%p259) target = $region16
        $region15: #{tpu_custom_call.1} parent=11 // pred_region
          %263 = vsyncadd [#allocation6], 0
          %s264 = sshll.u32 %s1, 4
          %s265 = int_to_ptr.hbm [resolvable:$true] %s264
          %s266 = sshll.u32 [#allocation5], 4
          %s267 = int_to_ptr.vmem [resolvable:$true] %s266
          %272 = dma.hbm_to_vmem [thread:$0]  %s265, 1024, %s267, [#allocation6], 64, 64, 4
        $region16: #{tpu_custom_call.1} parent=11 // pred_fallthru
          _
        // Predicated region
        $region17: #{tpu_custom_call.1} parent=11 // pred_check
          %p273 = pneg %p92
        $region18: #{tpu_custom_call.1} parent=11 // pred_check_branch
          %275 = sbr.rel (%p273) target = $region20
        $region19: #{tpu_custom_call.1} parent=11 // pred_region
          _
        $region20: #{tpu_custom_call.1} parent=11 // pred_fallthru
          _
        // Predicated region
        $region21: #{tpu_custom_call.1} parent=11 // pred_check
          %p276 = pneg %p113
        $region22: #{tpu_custom_call.1} parent=11 // pred_check_branch
          %278 = sbr.rel (%p276) target = $region24
        $region23: #{tpu_custom_call.1} parent=11 // pred_region
          %280 = vsyncadd [#allocation6], 0
          %s282 = sshll.u32 %s3, 4
          %s283 = int_to_ptr.hbm [resolvable:$true] %s282
          %s284 = sshll.u32 [#allocation7], 4
          %s285 = int_to_ptr.vmem [resolvable:$true] %s284
          %287 = dma.hbm_to_vmem [thread:$0]  %s283, 16, %s285, [#allocation6]
        $region24: #{tpu_custom_call.1} parent=11 // pred_fallthru
          _
        // Predicated region
        $region25: #{tpu_custom_call.1} parent=11 // pred_check
          %p288 = pneg %p134
        $region26: #{tpu_custom_call.1} parent=11 // pred_check_branch
          %290 = sbr.rel (%p288) target = $region28
        $region27: #{tpu_custom_call.1} parent=11 // pred_region
          %292 = vsyncadd [#allocation9], 0
          %s294 = sshll.u32 %s4, 4
          %s295 = int_to_ptr.hbm [resolvable:$true] %s294
          %s296 = sshll.u32 [#allocation8], 4
          %s297 = int_to_ptr.vmem [resolvable:$true] %s296
          %299 = dma.hbm_to_vmem [thread:$0]  %s295, 16, %s297, [#allocation9]
        $region28: #{tpu_custom_call.1} parent=11 // pred_fallthru
          _
        // Predicated region
        $region29: #{tpu_custom_call.1} parent=11 // pred_check
          %p300 = pneg %p155
        $region30: #{tpu_custom_call.1} parent=11 // pred_check_branch
          %302 = sbr.rel (%p300) target = $region32
        $region31: #{tpu_custom_call.1} parent=11 // pred_region
          %304 = vsyncadd [#allocation9], 0
          %s305 = sshll.u32 %s5, 4
          %s306 = int_to_ptr.hbm [resolvable:$true] %s305
          %s307 = sshll.u32 [#allocation10], 4
          %s308 = int_to_ptr.vmem [resolvable:$true] %s307
          %313 = dma.hbm_to_vmem [thread:$0]  %s306, 1024, %s308, [#allocation9], 64, 64, 4
        $region32: #{tpu_custom_call.1} parent=11 // pred_fallthru
          _
        // Predicated region
        $region33: #{tpu_custom_call.1} parent=11 // pred_check
          %p314 = pneg %p176
        $region34: #{tpu_custom_call.1} parent=11 // pred_check_branch
          %316 = sbr.rel (%p314) target = $region36
        $region35: #{tpu_custom_call.1} parent=11 // pred_region
          _
        $region36: #{tpu_custom_call.1} parent=11 // pred_fallthru
          _
        // Predicated region
        $region37: #{tpu_custom_call.1} parent=11 // pred_check
          %p317 = pneg %p197
        $region38: #{tpu_custom_call.1} parent=11 // pred_check_branch
          %319 = sbr.rel (%p317) target = $region40
        $region39: #{tpu_custom_call.1} parent=11 // pred_region
          %321 = vsyncadd [#allocation12], 0
          %s322 = sshll.u32 %s7, 4
          %s323 = int_to_ptr.hbm [resolvable:$true] %s322
          %s324 = sshll.u32 [#allocation11], 4
          %s325 = int_to_ptr.vmem [resolvable:$true] %s324
          %330 = dma.hbm_to_vmem [thread:$0]  %s323, 2048, %s325, [#allocation12], 128, 128, 8
        $region40: #{tpu_custom_call.1} parent=11 // pred_fallthru
          _
        // Predicated region
        $region41: #{tpu_custom_call.1} parent=11 // pred_check
          %p331 = pneg %p218
        $region42: #{tpu_custom_call.1} parent=11 // pred_check_branch
          %333 = sbr.rel (%p331) target = $region44
        $region43: #{tpu_custom_call.1} parent=11 // pred_region
          _
        $region44: #{tpu_custom_call.1} parent=11 // pred_fallthru
          _
      $region12: #{tpu_custom_call.1} parent=5 // pred_fallthru
        _
      %p334 = scmp.lt.s32.totalorder %s24, 2
      // Predicated region
      $region45: #{tpu_custom_call.1} parent=5 // pred_check
        %p335 = pneg %p334
      $region46: #{tpu_custom_call.1} parent=5 // pred_check_branch
        %337 = sbr.rel (%p335) target = $region48
      $region47: #{tpu_custom_call.1} parent=5 // pred_region
        // Predicated region
        $region49: #{tpu_custom_call.1} parent=47 // pred_check
          %p338 = pneg %p44
        $region50: #{tpu_custom_call.1} parent=47 // pred_check_branch
          %340 = sbr.rel (%p338) target = $region52
        $region51: #{tpu_custom_call.1} parent=47 // pred_region
          %s341 = sand.u32 %s34, 1
          %s342 = scalar_lea.sflag [#allocation3], %s341
          %s343 = sand.u32 %s34, 1
          %s344 = smul.addr %s343, 16
          %s345 = scalar_lea.vmem [#allocation2], %s344
          %s346 = smul.u32 2, %s24
          %348 = vsyncadd %s342, 0
          %s349 = smul.addr %s346, 8
          %s350 = scalar_lea.hbm %s0, %s349
          %s351 = sshll.u32 %s350, 4
          %s352 = int_to_ptr.hbm [resolvable:$true] %s351
          %s353 = sshll.u32 %s345, 4
          %s354 = int_to_ptr.vmem [resolvable:$true] %s353
          %359 = dma.hbm_to_vmem [thread:$0]  %s352, 256, %s354, %s342, 128, 128, 8
        $region52: #{tpu_custom_call.1} parent=47 // pred_fallthru
          _
      $region48: #{tpu_custom_call.1} parent=5 // pred_fallthru
        _
      %p360 = scmp.le.s32.totalorder 1, %s24
      %p361 = scmp.lt.s32.totalorder %s24, 3
      %p362 = pnand %p360, %p361
      %p363 = pneg %p362
      // Predicated region
      $region53: #{tpu_custom_call.1} parent=5 // pred_check
        _
      $region54: #{tpu_custom_call.1} parent=5 // pred_check_branch
        %365 = sbr.rel (%p362) target = $region56
      $region55: #{tpu_custom_call.1} parent=5 // pred_region
        %s366 = ssub.s32 %s24, 1
        %s367 = sand.u32 %s37, 1
        %s368 = scalar_lea.sflag [#allocation3], %s367
        %s369 = sand.u32 %s37, 1
        %s370 = smul.addr %s369, 16
        %s371 = scalar_lea.vmem [#allocation2], %s370
        // Predicated region
        $region57: #{tpu_custom_call.1} parent=55 // pred_check
          %p372 = pneg %p50
        $region58: #{tpu_custom_call.1} parent=55 // pred_check_branch
          %374 = sbr.rel (%p372) target = $region60
        $region59: #{tpu_custom_call.1} parent=55 // pred_region
          %376 = dma.done %s368, 256
        $region60: #{tpu_custom_call.1} parent=55 // pred_fallthru
          _
        // Predicated region
        $region61: #{tpu_custom_call.1} parent=55 // pred_check
          %p377 = pneg %p71
        $region62: #{tpu_custom_call.1} parent=55 // pred_check_branch
          %379 = sbr.rel (%p377) target = $region64
        $region63: #{tpu_custom_call.1} parent=55 // pred_region
          %381 = dma.done [#allocation6], 1024
        $region64: #{tpu_custom_call.1} parent=55 // pred_fallthru
          _
        // Predicated region
        $region65: #{tpu_custom_call.1} parent=55 // pred_check
          %p382 = pneg %p113
        $region66: #{tpu_custom_call.1} parent=55 // pred_check_branch
          %384 = sbr.rel (%p382) target = $region68
        $region67: #{tpu_custom_call.1} parent=55 // pred_region
          %386 = dma.done [#allocation6], 16
        $region68: #{tpu_custom_call.1} parent=55 // pred_fallthru
          _
        // Predicated region
        $region69: #{tpu_custom_call.1} parent=55 // pred_check
          %p387 = pneg %p134
        $region70: #{tpu_custom_call.1} parent=55 // pred_check_branch
          %389 = sbr.rel (%p387) target = $region72
        $region71: #{tpu_custom_call.1} parent=55 // pred_region
          %391 = dma.done [#allocation9], 16
        $region72: #{tpu_custom_call.1} parent=55 // pred_fallthru
          _
        // Predicated region
        $region73: #{tpu_custom_call.1} parent=55 // pred_check
          %p392 = pneg %p155
        $region74: #{tpu_custom_call.1} parent=55 // pred_check_branch
          %394 = sbr.rel (%p392) target = $region76
        $region75: #{tpu_custom_call.1} parent=55 // pred_region
          %396 = dma.done [#allocation9], 1024
        $region76: #{tpu_custom_call.1} parent=55 // pred_fallthru
          _
        // Predicated region
        $region77: #{tpu_custom_call.1} parent=55 // pred_check
          %p397 = pneg %p197
        $region78: #{tpu_custom_call.1} parent=55 // pred_check_branch
          %399 = sbr.rel (%p397) target = $region80
        $region79: #{tpu_custom_call.1} parent=55 // pred_region
          %401 = dma.done [#allocation12], 2048
        $region80: #{tpu_custom_call.1} parent=55 // pred_fallthru
          _
        %s402 = sand.u32 %s37, 1
        %s403 = scalar_lea.sflag [#allocation3], %s402
        %s404 = sand.u32 %s37, 1
        %s405 = smul.addr %s404, 16
        %s406 = scalar_lea.vmem [#allocation2], %s405
        %p407 = pneg %p50
        %p408 = pneg %p47
        %p409 = pneg %p71
        %p410 = pneg %p68
        %p411 = pneg %p92
        %p412 = pneg %p89
        %p413 = pneg %p113
        %p414 = pneg %p110
        %p415 = pneg %p134
        %p416 = pneg %p131
        %p417 = pneg %p155
        %p418 = pneg %p152
        %p419 = pneg %p176
        %p420 = pneg %p173
        %p421 = pneg %p197
        %p422 = pneg %p194
        %p423 = pneg %p218
        %p424 = pneg %p215
        %p425 = pneg %p244
        %p426 = pneg %p241
        %s427 = sand.u32 %s231, 1
        %s428 = scalar_lea.sflag [#allocation4], %s427
        %s429 = sand.u32 %s231, 1
        %s430 = smul.addr %s429, 32
        %s431 = scalar_lea.vmem [#allocation13], %s430
        %s432 = smul.u32 2, %s29
        %s433 = smul.u32 2, %s29
        %v434 = vld [vmem:[%s371] sm:$0xff]
        %v435 = vld [vmem:[%s371 + $0x8] sm:$0xff]
        %v436 = vpack.c.bf16 %v435, %v434
        %v437 = vld [vmem:[#allocation5] sm:$0xf]
        %v438 = vld [vmem:[#allocation5 + $0x4] sm:$0xf]
        %v439 = vld [vmem:[#allocation5 + $0x8] sm:$0xf]
        %v440 = vld [vmem:[#allocation5 + $0xc] sm:$0xf]
        %v441 = vld [vmem:[#allocation5 + $0x10] sm:$0xf]
        %v442 = vld [vmem:[#allocation5 + $0x14] sm:$0xf]
        %v443 = vld [vmem:[#allocation5 + $0x18] sm:$0xf]
        %v444 = vld [vmem:[#allocation5 + $0x1c] sm:$0xf]
        %v445 = vld [vmem:[#allocation5 + $0x20] sm:$0xf]
        %v446 = vld [vmem:[#allocation5 + $0x24] sm:$0xf]
        %v447 = vld [vmem:[#allocation5 + $0x28] sm:$0xf]
        %v448 = vld [vmem:[#allocation5 + $0x2c] sm:$0xf]
        %v449 = vld [vmem:[#allocation5 + $0x30] sm:$0xf]
        %v450 = vld [vmem:[#allocation5 + $0x34] sm:$0xf]
        %v451 = vld [vmem:[#allocation5 + $0x38] sm:$0xf]
        %v452 = vld [vmem:[#allocation5 + $0x3c] sm:$0xf]
        %v453 = vld [vmem:[%s2] sm:$0x1]
        %v455 = vperm.slane %v453, 0
        %v473 = vunpack.c.l.b16 %v437
        %v474 = vunpack.c.l.b16 %v438
        %v475 = vunpack.c.l.b16 %v439
        %v476 = vunpack.c.l.b16 %v440
        %v477 = vunpack.c.l.b16 %v441
        %v478 = vunpack.c.l.b16 %v442
        %v479 = vunpack.c.l.b16 %v443
        %v480 = vunpack.c.l.b16 %v444
        %v481 = vunpack.c.l.b16 %v445
        %v482 = vunpack.c.l.b16 %v446
        %v483 = vunpack.c.l.b16 %v447
        %v484 = vunpack.c.l.b16 %v448
        %v485 = vunpack.c.l.b16 %v449
        %v486 = vunpack.c.l.b16 %v450
        %v487 = vunpack.c.l.b16 %v451
        %v488 = vunpack.c.l.b16 %v452
        %v489 = vpack.c.b16 %v474, %v473
        %v490 = vpack.c.b16 %v476, %v475
        %v491 = vpack.c.b16 %v478, %v477
        %v492 = vpack.c.b16 %v480, %v479
        %v493 = vpack.c.b16 %v482, %v481
        %v494 = vpack.c.b16 %v484, %v483
        %v495 = vpack.c.b16 %v486, %v485
        %v496 = vpack.c.b16 %v488, %v487
        %505 = vmatpush.bf16.msra.mxu0 %v496
        %506 = vmatpush.bf16.msra.mxu0 %v495
        %507 = vmatpush.bf16.msra.mxu0 %v494
        %508 = vmatpush.bf16.msra.mxu0 %v493
        %509 = vmatpush.bf16.msra.mxu0 %v492
        %510 = vmatpush.bf16.msra.mxu0 %v491
        %511 = vmatpush.bf16.msra.mxu0 %v490
        %512 = vmatpush.bf16.msra.mxu0 %v489
        %513 = vmatmul.bf16.gmra.mxu0 %v436
        %v514 = vpop.f32.mrf.mxu0
        %v515 = vadd.f32 %v455, %v514
        %v516 = vpop.f32.mrf.mxu0
        %v517 = vadd.f32 %v455, %v516
        %518 = vdwg.mxu0
        %519 = vadd.xlane.f32.xlu0 %v515
        %v520 = vpop.xlane.xlu0 %519
        %521 = vadd.xlane.f32.xlu0 %v517
        %v522 = vpop.xlane.xlu0 %521
        %v523 = vrcp.pop 128.0
        %v524 = vmul.f32 128.0, %v523
        %v525 = vsub.f32 1.0, %v524
        %v526 = vmul.f32 %v523, %v525
        %v527 = vadd.f32 %v523, %v526
        %vm528 = vweird.f32 %v523
        %v529 = vsel %vm528, %v523, %v527
        %v530 = vmul.f32 %v520, %v529
        %v531 = vmul.f32 %v522, %v529
        %v532 = vsub.f32 %v515, %v530
        %v533 = vsub.f32 %v517, %v531
        %v534 = vmul.f32 %v532, %v532
        %v535 = vmul.f32 %v533, %v533
        %536 = vadd.xlane.f32.xlu0 %v534
        %v537 = vpop.xlane.xlu0 %536
        %538 = vadd.xlane.f32.xlu0 %v535
        %v539 = vpop.xlane.xlu0 %538
        %v540 = vmul.f32 %v537, %v529
        %v541 = vmul.f32 %v539, %v529
        %v542 = vadd.f32 %v540, 1e-05
        %v543 = vadd.f32 %v541, 1e-05
        %v544 = vrsqrt.pop %v542
        %v545 = vmul.f32 %v544, %v542
        %v546 = vmul.f32 %v545, %v544
        %v547 = vmul.f32 0.5, %v546
        %v548 = vsub.f32 1.5, %v547
        %v549 = vmul.f32 %v544, %v548
        %vm550 = vweird.f32 %v542
        %vm551 = vweird.f32 %v544
        %vm552 = vmor %vm550, %vm551
        %v553 = vsel %vm552, %v544, %v549
        %v554 = vrsqrt.pop %v543
        %v555 = vmul.f32 %v554, %v543
        %v556 = vmul.f32 %v555, %v554
        %v557 = vmul.f32 0.5, %v556
        %v558 = vsub.f32 1.5, %v557
        %v559 = vmul.f32 %v554, %v558
        %vm560 = vweird.f32 %v543
        %vm561 = vweird.f32 %v554
        %vm562 = vmor %vm560, %vm561
        %v563 = vsel %vm562, %v554, %v559
        %v564 = vmul.f32 %v532, %v553
        %v565 = vmul.f32 %v533, %v563
        %v566 = vld [vmem:[#allocation7] sm:$0x1]
        %v568 = vperm.slane %v566, 0
        %v570 = vmul.f32 %v564, %v568
        %v571 = vmul.f32 %v565, %v568
        %v572 = vld [vmem:[#allocation8] sm:$0x1]
        %v574 = vperm.slane %v572, 0
        %v576 = vadd.f32 %v570, %v574
        %v577 = vadd.f32 %v571, %v574
        %578 = vst [vmem:[%s431] sm:$0xff] %v576
        %579 = vst [vmem:[%s431 + $0x10] sm:$0xff] %v577
        %v580 = vpack.c.bf16 %v577, %v576
        %v581 = vld [vmem:[#allocation10] sm:$0xf]
        %v582 = vld [vmem:[#allocation10 + $0x4] sm:$0xf]
        %v583 = vld [vmem:[#allocation10 + $0x8] sm:$0xf]
        %v584 = vld [vmem:[#allocation10 + $0xc] sm:$0xf]
        %v585 = vld [vmem:[#allocation10 + $0x10] sm:$0xf]
        %v586 = vld [vmem:[#allocation10 + $0x14] sm:$0xf]
        %v587 = vld [vmem:[#allocation10 + $0x18] sm:$0xf]
        %v588 = vld [vmem:[#allocation10 + $0x1c] sm:$0xf]
        %v589 = vld [vmem:[#allocation10 + $0x20] sm:$0xf]
        %v590 = vld [vmem:[#allocation10 + $0x24] sm:$0xf]
        %v591 = vld [vmem:[#allocation10 + $0x28] sm:$0xf]
        %v592 = vld [vmem:[#allocation10 + $0x2c] sm:$0xf]
        %v593 = vld [vmem:[#allocation10 + $0x30] sm:$0xf]
        %v594 = vld [vmem:[#allocation10 + $0x34] sm:$0xf]
        %v595 = vld [vmem:[#allocation10 + $0x38] sm:$0xf]
        %v596 = vld [vmem:[#allocation10 + $0x3c] sm:$0xf]
        %v597 = vld [vmem:[%s6] sm:$0x1]
        %v599 = vperm.slane %v597, 0
        %v617 = vunpack.c.l.b16 %v581
        %v618 = vunpack.c.l.b16 %v582
        %v619 = vunpack.c.l.b16 %v583
        %v620 = vunpack.c.l.b16 %v584
        %v621 = vunpack.c.l.b16 %v585
        %v622 = vunpack.c.l.b16 %v586
        %v623 = vunpack.c.l.b16 %v587
        %v624 = vunpack.c.l.b16 %v588
        %v625 = vunpack.c.l.b16 %v589
        %v626 = vunpack.c.l.b16 %v590
        %v627 = vunpack.c.l.b16 %v591
        %v628 = vunpack.c.l.b16 %v592
        %v629 = vunpack.c.l.b16 %v593
        %v630 = vunpack.c.l.b16 %v594
        %v631 = vunpack.c.l.b16 %v595
        %v632 = vunpack.c.l.b16 %v596
        %v633 = vpack.c.b16 %v618, %v617
        %v634 = vpack.c.b16 %v620, %v619
        %v635 = vpack.c.b16 %v622, %v621
        %v636 = vpack.c.b16 %v624, %v623
        %v637 = vpack.c.b16 %v626, %v625
        %v638 = vpack.c.b16 %v628, %v627
        %v639 = vpack.c.b16 %v630, %v629
        %v640 = vpack.c.b16 %v632, %v631
        %649 = vmatpush.bf16.msra.mxu0 %v640
        %650 = vmatpush.bf16.msra.mxu0 %v639
        %651 = vmatpush.bf16.msra.mxu0 %v638
        %652 = vmatpush.bf16.msra.mxu0 %v637
        %653 = vmatpush.bf16.msra.mxu0 %v636
        %654 = vmatpush.bf16.msra.mxu0 %v635
        %655 = vmatpush.bf16.msra.mxu0 %v634
        %656 = vmatpush.bf16.msra.mxu0 %v633
        %657 = vmatmul.bf16.gmra.mxu0 %v580
        %v658 = vpop.f32.mrf.mxu0
        %v659 = vadd.f32 %v599, %v658
        %v660 = vpop.f32.mrf.mxu0
        %v661 = vadd.f32 %v599, %v660
        %662 = vdwg.mxu0
        %v663 = vpack.c.bf16 %v661, %v659
        %v664 = vld [vmem:[#allocation11] sm:$0xff]
        %v665 = vld [vmem:[#allocation11 + $0x8] sm:$0xff]
        %v666 = vld [vmem:[#allocation11 + $0x10] sm:$0xff]
        %v667 = vld [vmem:[#allocation11 + $0x18] sm:$0xff]
        %v668 = vld [vmem:[#allocation11 + $0x20] sm:$0xff]
        %v669 = vld [vmem:[#allocation11 + $0x28] sm:$0xff]
        %v670 = vld [vmem:[#allocation11 + $0x30] sm:$0xff]
        %v671 = vld [vmem:[#allocation11 + $0x38] sm:$0xff]
        %v672 = vld [vmem:[#allocation11 + $0x40] sm:$0xff]
        %v673 = vld [vmem:[#allocation11 + $0x48] sm:$0xff]
        %v674 = vld [vmem:[#allocation11 + $0x50] sm:$0xff]
        %v675 = vld [vmem:[#allocation11 + $0x58] sm:$0xff]
        %v676 = vld [vmem:[#allocation11 + $0x60] sm:$0xff]
        %v677 = vld [vmem:[#allocation11 + $0x68] sm:$0xff]
        %v678 = vld [vmem:[#allocation11 + $0x70] sm:$0xff]
        %v679 = vld [vmem:[#allocation11 + $0x78] sm:$0xff]
        %v680 = vld [vmem:[%s8] sm:$0x3]
        %v682 = vperm.slane %v680, 0
        %v683 = vperm.slane %v680, 1
        %v702 = vunpack.c.l.b16 %v664
        %v703 = vunpack.c.h.b16 %v664
        %v704 = vunpack.c.l.b16 %v665
        %v705 = vunpack.c.h.b16 %v665
        %v706 = vunpack.c.l.b16 %v666
        %v707 = vunpack.c.h.b16 %v666
        %v708 = vunpack.c.l.b16 %v667
        %v709 = vunpack.c.h.b16 %v667
        %v710 = vunpack.c.l.b16 %v668
        %v711 = vunpack.c.h.b16 %v668
        %v712 = vunpack.c.l.b16 %v669
        %v713 = vunpack.c.h.b16 %v669
        %v714 = vunpack.c.l.b16 %v670
        %v715 = vunpack.c.h.b16 %v670
        %v716 = vunpack.c.l.b16 %v671
        %v717 = vunpack.c.h.b16 %v671
        %v718 = vunpack.c.l.b16 %v672
        %v719 = vunpack.c.h.b16 %v672
        %v720 = vunpack.c.l.b16 %v673
        %v721 = vunpack.c.h.b16 %v673
        %v722 = vunpack.c.l.b16 %v674
        %v723 = vunpack.c.h.b16 %v674
        %v724 = vunpack.c.l.b16 %v675
        %v725 = vunpack.c.h.b16 %v675
        %v726 = vunpack.c.l.b16 %v676
        %v727 = vunpack.c.h.b16 %v676
        %v728 = vunpack.c.l.b16 %v677
        %v729 = vunpack.c.h.b16 %v677
        %v730 = vunpack.c.l.b16 %v678
        %v731 = vunpack.c.h.b16 %v678
        %v732 = vunpack.c.l.b16 %v679
        %v733 = vunpack.c.h.b16 %v679
        %v734 = vpack.c.b16 %v704, %v702
        %v735 = vpack.c.b16 %v705, %v703
        %v736 = vpack.c.b16 %v708, %v706
        %v737 = vpack.c.b16 %v709, %v707
        %v738 = vpack.c.b16 %v712, %v710
        %v739 = vpack.c.b16 %v713, %v711
        %v740 = vpack.c.b16 %v716, %v714
        %v741 = vpack.c.b16 %v717, %v715
        %v742 = vpack.c.b16 %v720, %v718
        %v743 = vpack.c.b16 %v721, %v719
        %v744 = vpack.c.b16 %v724, %v722
        %v745 = vpack.c.b16 %v725, %v723
        %v746 = vpack.c.b16 %v728, %v726
        %v747 = vpack.c.b16 %v729, %v727
        %v748 = vpack.c.b16 %v732, %v730
        %v749 = vpack.c.b16 %v733, %v731
        %766 = vmatpush.bf16.msra.mxu0 %v748
        %767 = vmatpush.bf16.msra.mxu0 %v746
        %768 = vmatpush.bf16.msra.mxu0 %v744
        %769 = vmatpush.bf16.msra.mxu0 %v742
        %770 = vmatpush.bf16.msra.mxu0 %v740
        %771 = vmatpush.bf16.msra.mxu0 %v738
        %772 = vmatpush.bf16.msra.mxu0 %v736
        %773 = vmatpush.bf16.msra.mxu0 %v734
        %774 = vmatmul.bf16.gmra.mxu0 %v663
        %v775 = vpop.f32.mrf.mxu0
        %v776 = vadd.f32 %v682, %v775
        %v777 = vpop.f32.mrf.mxu0
        %v778 = vadd.f32 %v682, %v777
        %779 = vdwg.mxu0
        %780 = vmatpush.bf16.msra.mxu0 %v749
        %781 = vmatpush.bf16.msra.mxu0 %v747
        %782 = vmatpush.bf16.msra.mxu0 %v745
        %783 = vmatpush.bf16.msra.mxu0 %v743
        %784 = vmatpush.bf16.msra.mxu0 %v741
        %785 = vmatpush.bf16.msra.mxu0 %v739
        %786 = vmatpush.bf16.msra.mxu0 %v737
        %787 = vmatpush.bf16.msra.mxu0 %v735
        %788 = vmatmul.bf16.gmra.mxu0 %v663
        %v789 = vpop.f32.mrf.mxu0
        %v790 = vadd.f32 %v683, %v789
        %v791 = vpop.f32.mrf.mxu0
        %v792 = vadd.f32 %v683, %v791
        %793 = vdwg.mxu0
        %v794 = vmax.f32 %v790, 0.0
        %v795 = vmax.f32 %v792, 0.0
        %v796 = vand.u32 2147483647, %v790
        %v797 = vand.u32 2147483647, %v792
        %v798 = vsub.f32 0.0, %v796
        %v799 = vsub.f32 0.0, %v797
        %v800 = vmul.f32 %v798, 1.442695
        %v801 = vpow.pop %v800
        %v802 = vmul.f32 %v799, 1.442695
        %v803 = vpow.pop %v802
        %v804 = vadd.f32 %v801, 1.0
        %v805 = vlog2.pop %v804
        %v806 = vmul.f32 %v805, 0.6931472
        %v807 = vmul.f32 -0.5, %v801
        %v808 = vadd.f32 %v807, 1.0
        %v809 = vmul.f32 %v808, %v801
        %v810 = vand.u32 2147483647, %v801
        %vm811 = vcmp.lt.f32.partialorder %v810, 0.0004427343
        %v812 = vsel %vm811, %v809, %v806
        %v813 = vadd.f32 %v803, 1.0
        %v814 = vlog2.pop %v813
        %v815 = vmul.f32 %v814, 0.6931472
        %v816 = vmul.f32 -0.5, %v803
        %v817 = vadd.f32 %v816, 1.0
        %v818 = vmul.f32 %v817, %v803
        %v819 = vand.u32 2147483647, %v803
        %vm820 = vcmp.lt.f32.partialorder %v819, 0.0004427343
        %v821 = vsel %vm820, %v818, %v815
        %v822 = vadd.f32 %v794, %v812
        %v823 = vadd.f32 %v795, %v821
        %v824 = vsub.f32 %v659, %v776
        %v825 = vsub.f32 %v661, %v778
        %v826 = vrcp.pop %v822
        %v827 = vmul.f32 %v822, %v826
        %v828 = vsub.f32 1.0, %v827
        %v829 = vmul.f32 %v826, %v828
        %v830 = vadd.f32 %v826, %v829
        %vm831 = vweird.f32 %v822
        %vm832 = vweird.f32 %v826
        %vm833 = vmor %vm831, %vm832
        %v834 = vsel %vm833, %v826, %v830
        %v835 = vand.u32 2147483647, %v822
        %vm836 = vcmp.eq.f32.partialorder %v835, 8.507059e+37
        %v837 = vand.u32 %v822, 2147483648
        %v838 = vor.u32 1.1754944e-38, %v837
        %v839 = vsel %vm836, %v838, %v834
        %v840 = vmul.f32 %v824, %v839
        %v841 = vrcp.pop %v823
        %v842 = vmul.f32 %v823, %v841
        %v843 = vsub.f32 1.0, %v842
        %v844 = vmul.f32 %v841, %v843
        %v845 = vadd.f32 %v841, %v844
        %vm846 = vweird.f32 %v823
        %vm847 = vweird.f32 %v841
        %vm848 = vmor %vm846, %vm847
        %v849 = vsel %vm848, %v841, %v845
        %v850 = vand.u32 2147483647, %v823
        %vm851 = vcmp.eq.f32.partialorder %v850, 8.507059e+37
        %v852 = vand.u32 %v823, 2147483648
        %v853 = vor.u32 1.1754944e-38, %v852
        %v854 = vsel %vm851, %v853, %v849
        %v855 = vmul.f32 %v825, %v854
        %v856 = vmul.f32 %v840, -0.5
        %v857 = vmul.f32 %v855, -0.5
        %v858 = vmul.f32 %v856, %v840
        %v859 = vmul.f32 %v857, %v855
        %v860 = vmul.f32 %v858, 1.442695
        %v861 = vpow.pop %v860
        %v862 = vmul.f32 %v859, 1.442695
        %v863 = vpow.pop %v862
        %864 = vst [vmem:[%s431 + $0x8] sm:$0xff] %v861
        %865 = vst [vmem:[%s431 + $0x18] sm:$0xff] %v863
        %s866 = sand.u32 %s231, 1
        %s867 = scalar_lea.sflag [#allocation4], %s866
        %s868 = sand.u32 %s231, 1
        %s869 = smul.addr %s868, 32
        %s870 = scalar_lea.vmem [#allocation13], %s869
        // Predicated region
        $region81: #{tpu_custom_call.1} parent=55 // pred_check
          %p871 = pneg %p241
        $region82: #{tpu_custom_call.1} parent=55 // pred_check_branch
          %873 = sbr.rel (%p871) target = $region84
        $region83: #{tpu_custom_call.1} parent=55 // pred_region
          %s874 = smul.u32 2, %s29
          %876 = vsyncadd %s867, 0
          %s877 = smul.addr %s874, 2
          %s878 = smul.addr %s877, 8
          %s879 = scalar_lea.hbm %s9, %s878
          %s880 = sshll.u32 %s870, 4
          %s881 = int_to_ptr.vmem [resolvable:$true] %s880
          %s882 = sshll.u32 %s879, 4
          %s883 = int_to_ptr.hbm [resolvable:$true] %s882
          %888 = dma.vmem_to_hbm [thread:$0]  %s881, 512, %s883, %s867, 256, 256, 16
        $region84: #{tpu_custom_call.1} parent=55 // pred_fallthru
          _
      $region56: #{tpu_custom_call.1} parent=5 // pred_fallthru
        _
      %p889 = scmp.le.s32.totalorder 2, %s24
      // Predicated region
      $region85: #{tpu_custom_call.1} parent=5 // pred_check
        %p890 = pneg %p889
      $region86: #{tpu_custom_call.1} parent=5 // pred_check_branch
        %892 = sbr.rel (%p890) target = $region88
      $region87: #{tpu_custom_call.1} parent=5 // pred_region
        %s893 = ssub.s32 %s24, 2
        // Predicated region
        $region89: #{tpu_custom_call.1} parent=87 // pred_check
          %p894 = pneg %p247
        $region90: #{tpu_custom_call.1} parent=87 // pred_check_branch
          %896 = sbr.rel (%p894) target = $region92
        $region91: #{tpu_custom_call.1} parent=87 // pred_region
          %s897 = sand.u32 %s232, 1
          %s898 = scalar_lea.sflag [#allocation4], %s897
          %s899 = sand.u32 %s232, 1
          %s900 = smul.addr %s899, 32
          %s901 = scalar_lea.vmem [#allocation13], %s900
          %903 = dma.done %s898, 512
        $region92: #{tpu_custom_call.1} parent=87 // pred_fallthru
          _
      $region88: #{tpu_custom_call.1} parent=5 // pred_fallthru
        _
    $region6: #{tpu_custom_call.1} parent=1 // loop_footer
      %s28 = sadd.s32 1, %s24
    $region7: #{tpu_custom_call.1} parent=1 // loop_footer_branch
      %23 = sbr.rel target = $region3
    $region8: #{tpu_custom_call.1} parent=1 // loop_exit
      _
    %904 = vsyncpa [#allocation3], 1
    %s905 = scalar_lea.sflag [#allocation3], 1
    %906 = vsyncpa %s905, 1
    %907 = vsyncpa [#allocation6], 1
    %908 = vsyncpa [#allocation9], 1
    %909 = vsyncpa [#allocation12], 1
    %910 = vsyncpa [#allocation4], 1
    %s911 = scalar_lea.sflag [#allocation4], 1
    %912 = vsyncpa %s911, 1

// kernel: tpu_custom_call.1
$region0: #{tpu_custom_call.1}
  #allocation0 [shape = 'u32[]', space=smem, size = 0x4, offset = 0x4, fixed_abs, tag = 'smem constant byte address 0x4 - core index']
  #allocation1 [shape = 'u32[72,128]{1,0:T(1,128)}', space=vmem, size = 0x9000, scoped, tag = 'internal scratch']
  %s0 = inlined_call_operand.hbm [shape: f32[32,128], index: 0, kind: input, shape index: {}]
  %s1 = inlined_call_operand.hbm [shape: bf16[128,128], index: 1, kind: input, shape index: {}]
  %s2 = inlined_call_operand.vmem [shape: f32[1,128], index: 2, kind: input, shape index: {}]
  %s3 = inlined_call_operand.hbm [shape: f32[1,128], index: 3, kind: input, shape index: {}]
  %s4 = inlined_call_operand.hbm [shape: f32[1,128], index: 4, kind: input, shape index: {}]
  %s5 = inlined_call_operand.hbm [shape: bf16[128,128], index: 5, kind: input, shape index: {}]
  %s6 = inlined_call_operand.vmem [shape: f32[1,128], index: 6, kind: input, shape index: {}]
  %s7 = inlined_call_operand.hbm [shape: bf16[128,256], index: 7, kind: input, shape index: {}]
  %s8 = inlined_call_operand.vmem [shape: f32[1,256], index: 8, kind: input, shape index: {}]
  %s9 = inlined_call_operand.hbm [shape: f32[32,256], index: 9, kind: output, shape index: {}]
  %s10 = sld [smem:[#allocation0]]
  $region93: #{tpu_custom_call.1} parent=0
    _
  %s12 = ssub.s32 1, %s10
  %s13 = scalar_select 0, %s12, %s10
  $region1: #{tpu_custom_call.1} parent=0
    #allocation2 [shape = 'u8[16384]{0}', space=vmem, size = 0x4000, scoped, tag = 'input window, operand 0']
    #allocation3 [shape = 's32[2]{0}', space=sflag, size = 0x8, scoped, tag = 'scoped memory for tpu_custom_call.1']
    #allocation4 [shape = 's32[2]{0}', space=sflag, size = 0x8, scoped, tag = 'scoped memory for tpu_custom_call.1']
    #allocation5 [shape = 'u8[32768]{0}', space=vmem, size = 0x8000, scoped, tag = 'input window, operand 1, single buffered']
    #allocation6 [shape = 's32[1]{0}', space=sflag, size = 0x4, scoped, tag = 'scoped memory for tpu_custom_call.1']
    #allocation7 [shape = 'u8[512]{0}', space=vmem, size = 0x400, scoped, tag = 'input window, operand 3, single buffered']
    #allocation8 [shape = 'u8[512]{0}', space=vmem, size = 0x400, scoped, tag = 'input window, operand 4, single buffered']
    #allocation9 [shape = 's32[1]{0}', space=sflag, size = 0x4, scoped, tag = 'scoped memory for tpu_custom_call.1']
    #allocation10 [shape = 'u8[32768]{0}', space=vmem, size = 0x8000, scoped, tag = 'input window, operand 5, single buffered']
    #allocation11 [shape = 'u8[65536]{0}', space=vmem, size = 0x10000, scoped, tag = 'input window, operand 7, single buffered']
    #allocation12 [shape = 's32[1]{0}', space=sflag, size = 0x4, scoped, tag = 'scoped memory for tpu_custom_call.1']
    #allocation13 [shape = 'u8[32768]{0}', space=vmem, size = 0x8000, scoped, tag = 'output window, operand 0']
    %14 = vsyncpa [#allocation3], 0
    %s15 = scalar_lea.sflag [#allocation3], 1
    %16 = vsyncpa %s15, 0
    %17 = vsyncpa [#allocation6], 0
    %18 = vsyncpa [#allocation9], 0
    %19 = vsyncpa [#allocation12], 0
    %20 = vsyncpa [#allocation4], 0
    %s21 = scalar_lea.sflag [#allocation4], 1
    %22 = vsyncpa %s21, 0
    loop: start=0, step=1, limit=4
    $region2: #{tpu_custom_call.1} parent=1 // loop_pre_header
      _
    $region3: #{tpu_custom_call.1} parent=1 // loop_header
      %s24 = sphi 0, %s28
      %p25 = scmp.ge.s32.totalorder %s24, 4
      %s34 = sphi 0, %s36
      %s37 = sphi 0, %s34
      %s38 = sphi 0, %s37
      %s54 = sphi 0, %s38
      %s58 = sphi 0, %s58
      %s60 = sphi 0, %s58
      %s61 = sphi 0, %s60
      %s75 = sphi 0, %s61
      %s79 = sphi 0, %s79
      %s81 = sphi 0, %s79
      %s82 = sphi 0, %s81
      %s96 = sphi 0, %s82
      %s100 = sphi 0, %s100
      %s102 = sphi 0, %s100
      %s103 = sphi 0, %s102
      %s117 = sphi 0, %s103
      %s121 = sphi 0, %s121
      %s123 = sphi 0, %s121
      %s124 = sphi 0, %s123
      %s138 = sphi 0, %s124
      %s142 = sphi 0, %s142
      %s144 = sphi 0, %s142
      %s145 = sphi 0, %s144
      %s159 = sphi 0, %s145
      %s163 = sphi 0, %s163
      %s165 = sphi 0, %s163
      %s166 = sphi 0, %s165
      %s180 = sphi 0, %s166
      %s184 = sphi 0, %s184
      %s186 = sphi 0, %s184
      %s187 = sphi 0, %s186
      %s201 = sphi 0, %s187
      %s205 = sphi 0, %s205
      %s207 = sphi 0, %s205
      %s208 = sphi 0, %s207
      %s222 = sphi 0, %s208
      %s228 = sphi 0, %s230
      %s231 = sphi 0, %s228
      %s232 = sphi 0, %s231
      %s248 = sphi 0, %s232
    $region4: #{tpu_custom_call.1} parent=1 // loop_header_branch
      %27 = sbr.rel (%p25) target = $region8
    $region5: #{tpu_custom_call.1} parent=1 // loop_body
      %s29 = ssub.s32 %s24, 1
      %s30 = ssub.s32 %s24, 2
      %s31 = sadd.s32 %s24, 1
      %s32 = ssub.s32 %s24, %s31
      %p33 = scmp.eq.s32.totalorder %s32, 0
      %s35 = sadd.s32 %s34, 1
      %s36 = scalar_select %p33, %s34, %s35
      %p39 = pneg %p33
      %p40 = scmp.eq.s32.totalorder %s24, 1
      %p41 = por %p39, %p40
      %p42 = scmp.ne.s32.totalorder %s34, %s37
      %p43 = scmp.eq.s32.totalorder %s24, 0
      %p44 = por %p42, %p43
      %p45 = scmp.ne.s32.totalorder %s34, %s37
      %p46 = scmp.eq.s32.totalorder %s29, 1
      %p47 = por %p45, %p46
      %p48 = scmp.ne.s32.totalorder %s37, %s38
      %p49 = scmp.eq.s32.totalorder %s29, 0
      %p50 = por %p48, %p49
      %p51 = scmp.ne.s32.totalorder %s37, %s38
      %p52 = scmp.eq.s32.totalorder %s30, 1
      %p53 = por %p51, %p52
      %p55 = scmp.ne.s32.totalorder %s38, %s54
      %p56 = scmp.eq.s32.totalorder %s30, 0
      %p57 = por %p55, %p56
      %s59 = sadd.s32 %s58, 1
      %p62 = scmp.eq.s32.totalorder %s24, 1
      %p63 = scmp.ne.s32.totalorder %s58, %s60
      %p64 = scmp.eq.s32.totalorder %s24, 0
      %p65 = por %p63, %p64
      %p66 = scmp.ne.s32.totalorder %s58, %s60
      %p67 = scmp.eq.s32.totalorder %s29, 1
      %p68 = por %p66, %p67
      %p69 = scmp.ne.s32.totalorder %s60, %s61
      %p70 = scmp.eq.s32.totalorder %s29, 0
      %p71 = por %p69, %p70
      %p72 = scmp.ne.s32.totalorder %s60, %s61
      %p73 = scmp.eq.s32.totalorder %s30, 1
      %p74 = por %p72, %p73
      %p76 = scmp.ne.s32.totalorder %s61, %s75
      %p77 = scmp.eq.s32.totalorder %s30, 0
      %p78 = por %p76, %p77
      %s80 = sadd.s32 %s79, 1
      %p83 = scmp.eq.s32.totalorder %s24, 1
      %p84 = scmp.ne.s32.totalorder %s79, %s81
      %p85 = scmp.eq.s32.totalorder %s24, 0
      %p86 = por %p84, %p85
      %p87 = scmp.ne.s32.totalorder %s79, %s81
      %p88 = scmp.eq.s32.totalorder %s29, 1
      %p89 = por %p87, %p88
      %p90 = scmp.ne.s32.totalorder %s81, %s82
      %p91 = scmp.eq.s32.totalorder %s29, 0
      %p92 = por %p90, %p91
      %p93 = scmp.ne.s32.totalorder %s81, %s82
      %p94 = scmp.eq.s32.totalorder %s30, 1
      %p95 = por %p93, %p94
      %p97 = scmp.ne.s32.totalorder %s82, %s96
      %p98 = scmp.eq.s32.totalorder %s30, 0
      %p99 = por %p97, %p98
      %s101 = sadd.s32 %s100, 1
      %p104 = scmp.eq.s32.totalorder %s24, 1
      %p105 = scmp.ne.s32.totalorder %s100, %s102
      %p106 = scmp.eq.s32.totalorder %s24, 0
      %p107 = por %p105, %p106
      %p108 = scmp.ne.s32.totalorder %s100, %s102
      %p109 = scmp.eq.s32.totalorder %s29, 1
      %p110 = por %p108, %p109
      %p111 = scmp.ne.s32.totalorder %s102, %s103
      %p112 = scmp.eq.s32.totalorder %s29, 0
      %p113 = por %p111, %p112
      %p114 = scmp.ne.s32.totalorder %s102, %s103
      %p115 = scmp.eq.s32.totalorder %s30, 1
      %p116 = por %p114, %p115
      %p118 = scmp.ne.s32.totalorder %s103, %s117
      %p119 = scmp.eq.s32.totalorder %s30, 0
      %p120 = por %p118, %p119
      %s122 = sadd.s32 %s121, 1
      %p125 = scmp.eq.s32.totalorder %s24, 1
      %p126 = scmp.ne.s32.totalorder %s121, %s123
      %p127 = scmp.eq.s32.totalorder %s24, 0
      %p128 = por %p126, %p127
      %p129 = scmp.ne.s32.totalorder %s121, %s123
      %p130 = scmp.eq.s32.totalorder %s29, 1
      %p131 = por %p129, %p130
      %p132 = scmp.ne.s32.totalorder %s123, %s124
      %p133 = scmp.eq.s32.totalorder %s29, 0
      %p134 = por %p132, %p133
      %p135 = scmp.ne.s32.totalorder %s123, %s124
      %p136 = scmp.eq.s32.totalorder %s30, 1
      %p137 = por %p135, %p136
      %p139 = scmp.ne.s32.totalorder %s124, %s138
      %p140 = scmp.eq.s32.totalorder %s30, 0
      %p141 = por %p139, %p140
      %s143 = sadd.s32 %s142, 1
      %p146 = scmp.eq.s32.totalorder %s24, 1
      %p147 = scmp.ne.s32.totalorder %s142, %s144
      %p148 = scmp.eq.s32.totalorder %s24, 0
      %p149 = por %p147, %p148
      %p150 = scmp.ne.s32.totalorder %s142, %s144
      %p151 = scmp.eq.s32.totalorder %s29, 1
      %p152 = por %p150, %p151
      %p153 = scmp.ne.s32.totalorder %s144, %s145
      %p154 = scmp.eq.s32.totalorder %s29, 0
      %p155 = por %p153, %p154
      %p156 = scmp.ne.s32.totalorder %s144, %s145
      %p157 = scmp.eq.s32.totalorder %s30, 1
      %p158 = por %p156, %p157
      %p160 = scmp.ne.s32.totalorder %s145, %s159
      %p161 = scmp.eq.s32.totalorder %s30, 0
      %p162 = por %p160, %p161
      %s164 = sadd.s32 %s163, 1
      %p167 = scmp.eq.s32.totalorder %s24, 1
      %p168 = scmp.ne.s32.totalorder %s163, %s165
      %p169 = scmp.eq.s32.totalorder %s24, 0
      %p170 = por %p168, %p169
      %p171 = scmp.ne.s32.totalorder %s163, %s165
      %p172 = scmp.eq.s32.totalorder %s29, 1
      %p173 = por %p171, %p172
      %p174 = scmp.ne.s32.totalorder %s165, %s166
      %p175 = scmp.eq.s32.totalorder %s29, 0
      %p176 = por %p174, %p175
      %p177 = scmp.ne.s32.totalorder %s165, %s166
      %p178 = scmp.eq.s32.totalorder %s30, 1
      %p179 = por %p177, %p178
      %p181 = scmp.ne.s32.totalorder %s166, %s180
      %p182 = scmp.eq.s32.totalorder %s30, 0
      %p183 = por %p181, %p182
      %s185 = sadd.s32 %s184, 1
      %p188 = scmp.eq.s32.totalorder %s24, 1
      %p189 = scmp.ne.s32.totalorder %s184, %s186
      %p190 = scmp.eq.s32.totalorder %s24, 0
      %p191 = por %p189, %p190
      %p192 = scmp.ne.s32.totalorder %s184, %s186
      %p193 = scmp.eq.s32.totalorder %s29, 1
      %p194 = por %p192, %p193
      %p195 = scmp.ne.s32.totalorder %s186, %s187
      %p196 = scmp.eq.s32.totalorder %s29, 0
      %p197 = por %p195, %p196
      %p198 = scmp.ne.s32.totalorder %s186, %s187
      %p199 = scmp.eq.s32.totalorder %s30, 1
      %p200 = por %p198, %p199
      %p202 = scmp.ne.s32.totalorder %s187, %s201
      %p203 = scmp.eq.s32.totalorder %s30, 0
      %p204 = por %p202, %p203
      %s206 = sadd.s32 %s205, 1
      %p209 = scmp.eq.s32.totalorder %s24, 1
      %p210 = scmp.ne.s32.totalorder %s205, %s207
      %p211 = scmp.eq.s32.totalorder %s24, 0
      %p212 = por %p210, %p211
      %p213 = scmp.ne.s32.totalorder %s205, %s207
      %p214 = scmp.eq.s32.totalorder %s29, 1
      %p215 = por %p213, %p214
      %p216 = scmp.ne.s32.totalorder %s207, %s208
      %p217 = scmp.eq.s32.totalorder %s29, 0
      %p218 = por %p216, %p217
      %p219 = scmp.ne.s32.totalorder %s207, %s208
      %p220 = scmp.eq.s32.totalorder %s30, 1
      %p221 = por %p219, %p220
      %p223 = scmp.ne.s32.totalorder %s208, %s222
      %p224 = scmp.eq.s32.totalorder %s30, 0
      %p225 = por %p223, %p224
      %s226 = ssub.s32 %s24, %s31
      %p227 = scmp.eq.s32.totalorder %s226, 0
      %s229 = sadd.s32 %s228, 1
      %s230 = scalar_select %p227, %s228, %s229
      %p233 = pneg %p227
      %p234 = scmp.eq.s32.totalorder %s24, 1
      %p235 = por %p233, %p234
      %p236 = scmp.ne.s32.totalorder %s228, %s231
      %p237 = scmp.eq.s32.totalorder %s24, 0
      %p238 = por %p236, %p237
      %p239 = scmp.ne.s32.totalorder %s228, %s231
      %p240 = scmp.eq.s32.totalorder %s29, 1
      %p241 = por %p239, %p240
      %p242 = scmp.ne.s32.totalorder %s231, %s232
      %p243 = scmp.eq.s32.totalorder %s29, 0
      %p244 = por %p242, %p243
      %p245 = scmp.ne.s32.totalorder %s231, %s232
      %p246 = scmp.eq.s32.totalorder %s30, 1
      %p247 = por %p245, %p246
      %p249 = scmp.ne.s32.totalorder %s232, %s248
      %p250 = scmp.eq.s32.totalorder %s30, 0
      %p251 = por %p249, %p250
      %p252 = scmp.le.s32.totalorder 1, %s24
      %p253 = scmp.lt.s32.totalorder %s24, 3
      %p254 = pnand %p252, %p253
      %p255 = pneg %p254
      // Predicated region
      $region9: #{tpu_custom_call.1} parent=5 // pred_check
        _
      $region10: #{tpu_custom_call.1} parent=5 // pred_check_branch
        %257 = sbr.rel (%p254) target = $region12
      $region11: #{tpu_custom_call.1} parent=5 // pred_region
        %s258 = ssub.s32 %s24, 1
        // Predicated region
        $region13: #{tpu_custom_call.1} parent=11 // pred_check
          %p259 = pneg %p71
        $region14: #{tpu_custom_call.1} parent=11 // pred_check_branch
          %261 = sbr.rel (%p259) target = $region16
        $region15: #{tpu_custom_call.1} parent=11 // pred_region
          %263 = vsyncadd [#allocation6], 0
          %s264 = sshll.u32 %s1, 4
          %s265 = int_to_ptr.hbm [resolvable:$true] %s264
          %s266 = sshll.u32 [#allocation5], 4
          %s267 = int_to_ptr.vmem [resolvable:$true] %s266
          %272 = dma.hbm_to_vmem [thread:$0]  %s265, 1024, %s267, [#allocation6], 64, 64, 4
        $region16: #{tpu_custom_call.1} parent=11 // pred_fallthru
          _
        // Predicated region
        $region17: #{tpu_custom_call.1} parent=11 // pred_check
          %p273 = pneg %p92
        $region18: #{tpu_custom_call.1} parent=11 // pred_check_branch
          %275 = sbr.rel (%p273) target = $region20
        $region19: #{tpu_custom_call.1} parent=11 // pred_region
          _
        $region20: #{tpu_custom_call.1} parent=11 // pred_fallthru
          _
        // Predicated region
        $region21: #{tpu_custom_call.1} parent=11 // pred_check
          %p276 = pneg %p113
        $region22: #{tpu_custom_call.1} parent=11 // pred_check_branch
          %278 = sbr.rel (%p276) target = $region24
        $region23: #{tpu_custom_call.1} parent=11 // pred_region
          %280 = vsyncadd [#allocation6], 0
          %s282 = sshll.u32 %s3, 4
          %s283 = int_to_ptr.hbm [resolvable:$true] %s282
          %s284 = sshll.u32 [#allocation7], 4
          %s285 = int_to_ptr.vmem [resolvable:$true] %s284
          %287 = dma.hbm_to_vmem [thread:$0]  %s283, 16, %s285, [#allocation6]
        $region24: #{tpu_custom_call.1} parent=11 // pred_fallthru
          _
        // Predicated region
        $region25: #{tpu_custom_call.1} parent=11 // pred_check
          %p288 = pneg %p134
        $region26: #{tpu_custom_call.1} parent=11 // pred_check_branch
          %290 = sbr.rel (%p288) target = $region28
        $region27: #{tpu_custom_call.1} parent=11 // pred_region
          %292 = vsyncadd [#allocation9], 0
          %s294 = sshll.u32 %s4, 4
          %s295 = int_to_ptr.hbm [resolvable:$true] %s294
          %s296 = sshll.u32 [#allocation8], 4
          %s297 = int_to_ptr.vmem [resolvable:$true] %s296
          %299 = dma.hbm_to_vmem [thread:$0]  %s295, 16, %s297, [#allocation9]
        $region28: #{tpu_custom_call.1} parent=11 // pred_fallthru
          _
        // Predicated region
        $region29: #{tpu_custom_call.1} parent=11 // pred_check
          %p300 = pneg %p155
        $region30: #{tpu_custom_call.1} parent=11 // pred_check_branch
          %302 = sbr.rel (%p300) target = $region32
        $region31: #{tpu_custom_call.1} parent=11 // pred_region
          %304 = vsyncadd [#allocation9], 0
          %s305 = sshll.u32 %s5, 4
          %s306 = int_to_ptr.hbm [resolvable:$true] %s305
          %s307 = sshll.u32 [#allocation10], 4
          %s308 = int_to_ptr.vmem [resolvable:$true] %s307
          %313 = dma.hbm_to_vmem [thread:$0]  %s306, 1024, %s308, [#allocation9], 64, 64, 4
        $region32: #{tpu_custom_call.1} parent=11 // pred_fallthru
          _
        // Predicated region
        $region33: #{tpu_custom_call.1} parent=11 // pred_check
          %p314 = pneg %p176
        $region34: #{tpu_custom_call.1} parent=11 // pred_check_branch
          %316 = sbr.rel (%p314) target = $region36
        $region35: #{tpu_custom_call.1} parent=11 // pred_region
          _
        $region36: #{tpu_custom_call.1} parent=11 // pred_fallthru
          _
        // Predicated region
        $region37: #{tpu_custom_call.1} parent=11 // pred_check
          %p317 = pneg %p197
        $region38: #{tpu_custom_call.1} parent=11 // pred_check_branch
          %319 = sbr.rel (%p317) target = $region40
        $region39: #{tpu_custom_call.1} parent=11 // pred_region
          %321 = vsyncadd [#allocation12], 0
          %s322 = sshll.u32 %s7, 4
          %s323 = int_to_ptr.hbm [resolvable:$true] %s322
          %s324 = sshll.u32 [#allocation11], 4
          %s325 = int_to_ptr.vmem [resolvable:$true] %s324
          %330 = dma.hbm_to_vmem [thread:$0]  %s323, 2048, %s325, [#allocation12], 128, 128, 8
        $region40: #{tpu_custom_call.1} parent=11 // pred_fallthru
          _
        // Predicated region
        $region41: #{tpu_custom_call.1} parent=11 // pred_check
          %p331 = pneg %p218
        $region42: #{tpu_custom_call.1} parent=11 // pred_check_branch
          %333 = sbr.rel (%p331) target = $region44
        $region43: #{tpu_custom_call.1} parent=11 // pred_region
          _
        $region44: #{tpu_custom_call.1} parent=11 // pred_fallthru
          _
      $region12: #{tpu_custom_call.1} parent=5 // pred_fallthru
        _
      %p334 = scmp.lt.s32.totalorder %s24, 2
      // Predicated region
      $region45: #{tpu_custom_call.1} parent=5 // pred_check
        %p335 = pneg %p334
      $region46: #{tpu_custom_call.1} parent=5 // pred_check_branch
        %337 = sbr.rel (%p335) target = $region48
      $region47: #{tpu_custom_call.1} parent=5 // pred_region
        // Predicated region
        $region49: #{tpu_custom_call.1} parent=47 // pred_check
          %p338 = pneg %p44
        $region50: #{tpu_custom_call.1} parent=47 // pred_check_branch
          %340 = sbr.rel (%p338) target = $region52
        $region51: #{tpu_custom_call.1} parent=47 // pred_region
          %s341 = sand.u32 %s34, 1
          %s342 = scalar_lea.sflag [#allocation3], %s341
          %s343 = sand.u32 %s34, 1
          %s344 = smul.addr %s343, 16
          %s345 = scalar_lea.vmem [#allocation2], %s344
          %s346 = smul.u32 2, %s24
          %348 = vsyncadd %s342, 0
          %s349 = smul.addr %s346, 8
          %s350 = scalar_lea.hbm %s0, %s349
          %s351 = sshll.u32 %s350, 4
          %s352 = int_to_ptr.hbm [resolvable:$true] %s351
          %s353 = sshll.u32 %s345, 4
          %s354 = int_to_ptr.vmem [resolvable:$true] %s353
          %359 = dma.hbm_to_vmem [thread:$0]  %s352, 256, %s354, %s342, 128, 128, 8
        $region52: #{tpu_custom_call.1} parent=47 // pred_fallthru
          _
      $region48: #{tpu_custom_call.1} parent=5 // pred_fallthru
        _
      %p360 = scmp.le.s32.totalorder 1, %s24
      %p361 = scmp.lt.s32.totalorder %s24, 3
      %p362 = pnand %p360, %p361
      %p363 = pneg %p362
      // Predicated region
      $region53: #{tpu_custom_call.1} parent=5 // pred_check
        _
      $region54: #{tpu_custom_call.1} parent=5 // pred_check_branch
        %365 = sbr.rel (%p362) target = $region56
      $region55: #{tpu_custom_call.1} parent=5 // pred_region
        %s366 = ssub.s32 %s24, 1
        %s367 = sand.u32 %s37, 1
        %s368 = scalar_lea.sflag [#allocation3], %s367
        %s369 = sand.u32 %s37, 1
        %s370 = smul.addr %s369, 16
        %s371 = scalar_lea.vmem [#allocation2], %s370
        // Predicated region
        $region57: #{tpu_custom_call.1} parent=55 // pred_check
          %p372 = pneg %p50
        $region58: #{tpu_custom_call.1} parent=55 // pred_check_branch
          %374 = sbr.rel (%p372) target = $region60
        $region59: #{tpu_custom_call.1} parent=55 // pred_region
          %376 = dma.done %s368, 256
        $region60: #{tpu_custom_call.1} parent=55 // pred_fallthru
          _
        // Predicated region
        $region61: #{tpu_custom_call.1} parent=55 // pred_check
          %p377 = pneg %p71
        $region62: #{tpu_custom_call.1} parent=55 // pred_check_branch
          %379 = sbr.rel (%p377) target = $region64
        $region63: #{tpu_custom_call.1} parent=55 // pred_region
          %381 = dma.done [#allocation6], 1024
        $region64: #{tpu_custom_call.1} parent=55 // pred_fallthru
          _
        // Predicated region
        $region65: #{tpu_custom_call.1} parent=55 // pred_check
          %p382 = pneg %p113
        $region66: #{tpu_custom_call.1} parent=55 // pred_check_branch
          %384 = sbr.rel (%p382) target = $region68
        $region67: #{tpu_custom_call.1} parent=55 // pred_region
          %386 = dma.done [#allocation6], 16
        $region68: #{tpu_custom_call.1} parent=55 // pred_fallthru
          _
        // Predicated region
        $region69: #{tpu_custom_call.1} parent=55 // pred_check
          %p387 = pneg %p134
        $region70: #{tpu_custom_call.1} parent=55 // pred_check_branch
          %389 = sbr.rel (%p387) target = $region72
        $region71: #{tpu_custom_call.1} parent=55 // pred_region
          %391 = dma.done [#allocation9], 16
        $region72: #{tpu_custom_call.1} parent=55 // pred_fallthru
          _
        // Predicated region
        $region73: #{tpu_custom_call.1} parent=55 // pred_check
          %p392 = pneg %p155
        $region74: #{tpu_custom_call.1} parent=55 // pred_check_branch
          %394 = sbr.rel (%p392) target = $region76
        $region75: #{tpu_custom_call.1} parent=55 // pred_region
          %396 = dma.done [#allocation9], 1024
        $region76: #{tpu_custom_call.1} parent=55 // pred_fallthru
          _
        // Predicated region
        $region77: #{tpu_custom_call.1} parent=55 // pred_check
          %p397 = pneg %p197
        $region78: #{tpu_custom_call.1} parent=55 // pred_check_branch
          %399 = sbr.rel (%p397) target = $region80
        $region79: #{tpu_custom_call.1} parent=55 // pred_region
          %401 = dma.done [#allocation12], 2048
        $region80: #{tpu_custom_call.1} parent=55 // pred_fallthru
          _
        %s402 = sand.u32 %s37, 1
        %s403 = scalar_lea.sflag [#allocation3], %s402
        %s404 = sand.u32 %s37, 1
        %s405 = smul.addr %s404, 16
        %s406 = scalar_lea.vmem [#allocation2], %s405
        %p407 = pneg %p50
        %p408 = pneg %p47
        %p409 = pneg %p71
        %p410 = pneg %p68
        %p411 = pneg %p92
        %p412 = pneg %p89
        %p413 = pneg %p113
        %p414 = pneg %p110
        %p415 = pneg %p134
        %p416 = pneg %p131
        %p417 = pneg %p155
        %p418 = pneg %p152
        %p419 = pneg %p176
        %p420 = pneg %p173
        %p421 = pneg %p197
        %p422 = pneg %p194
        %p423 = pneg %p218
        %p424 = pneg %p215
        %p425 = pneg %p244
        %p426 = pneg %p241
        %s427 = sand.u32 %s231, 1
        %s428 = scalar_lea.sflag [#allocation4], %s427
        %s429 = sand.u32 %s231, 1
        %s430 = smul.addr %s429, 32
        %s431 = scalar_lea.vmem [#allocation13], %s430
        %s432 = smul.u32 2, %s29
        %s433 = smul.u32 2, %s29
        %v434 = vld [vmem:[%s371] sm:$0xff]
        %v435 = vld [vmem:[%s371 + $0x8] sm:$0xff]
        %v436 = vpack.c.bf16 %v435, %v434
        %v437 = vld [vmem:[#allocation5] sm:$0xf]
        %v438 = vld [vmem:[#allocation5 + $0x4] sm:$0xf]
        %v439 = vld [vmem:[#allocation5 + $0x8] sm:$0xf]
        %v440 = vld [vmem:[#allocation5 + $0xc] sm:$0xf]
        %v441 = vld [vmem:[#allocation5 + $0x10] sm:$0xf]
        %v442 = vld [vmem:[#allocation5 + $0x14] sm:$0xf]
        %v443 = vld [vmem:[#allocation5 + $0x18] sm:$0xf]
        %v444 = vld [vmem:[#allocation5 + $0x1c] sm:$0xf]
        %v445 = vld [vmem:[#allocation5 + $0x20] sm:$0xf]
        %v446 = vld [vmem:[#allocation5 + $0x24] sm:$0xf]
        %v447 = vld [vmem:[#allocation5 + $0x28] sm:$0xf]
        %v448 = vld [vmem:[#allocation5 + $0x2c] sm:$0xf]
        %v449 = vld [vmem:[#allocation5 + $0x30] sm:$0xf]
        %v450 = vld [vmem:[#allocation5 + $0x34] sm:$0xf]
        %v451 = vld [vmem:[#allocation5 + $0x38] sm:$0xf]
        %v452 = vld [vmem:[#allocation5 + $0x3c] sm:$0xf]
        %v453 = vld [vmem:[%s2] sm:$0x1]
        %v455 = vperm.slane %v453, 0
        %v473 = vunpack.c.l.b16 %v437
        %v474 = vunpack.c.l.b16 %v438
        %v475 = vunpack.c.l.b16 %v439
        %v476 = vunpack.c.l.b16 %v440
        %v477 = vunpack.c.l.b16 %v441
        %v478 = vunpack.c.l.b16 %v442
        %v479 = vunpack.c.l.b16 %v443
        %v480 = vunpack.c.l.b16 %v444
        %v481 = vunpack.c.l.b16 %v445
        %v482 = vunpack.c.l.b16 %v446
        %v483 = vunpack.c.l.b16 %v447
        %v484 = vunpack.c.l.b16 %v448
        %v485 = vunpack.c.l.b16 %v449
        %v486 = vunpack.c.l.b16 %v450
        %v487 = vunpack.c.l.b16 %v451
        %v488 = vunpack.c.l.b16 %v452
        %v489 = vpack.c.b16 %v474, %v473
        %v490 = vpack.c.b16 %v476, %v475
        %v491 = vpack.c.b16 %v478, %v477
        %v492 = vpack.c.b16 %v480, %v479
        %v493 = vpack.c.b16 %v482, %v481
        %v494 = vpack.c.b16 %v484, %v483
        %v495 = vpack.c.b16 %v486, %v485
        %v496 = vpack.c.b16 %v488, %v487
        %505 = vmatpush.bf16.msra.mxu0 %v496
        %506 = vmatpush.bf16.msra.mxu0 %v495
        %507 = vmatpush.bf16.msra.mxu0 %v494
        %508 = vmatpush.bf16.msra.mxu0 %v493
        %509 = vmatpush.bf16.msra.mxu0 %v492
        %510 = vmatpush.bf16.msra.mxu0 %v491
        %511 = vmatpush.bf16.msra.mxu0 %v490
        %512 = vmatpush.bf16.msra.mxu0 %v489
        %513 = vmatmul.bf16.gmra.mxu0 %v436
        %v514 = vpop.f32.mrf.mxu0
        %v515 = vadd.f32 %v455, %v514
        %v516 = vpop.f32.mrf.mxu0
        %v517 = vadd.f32 %v455, %v516
        %518 = vdwg.mxu0
        %519 = vadd.xlane.f32.xlu0 %v515
        %v520 = vpop.xlane.xlu0 %519
        %521 = vadd.xlane.f32.xlu0 %v517
        %v522 = vpop.xlane.xlu0 %521
        %v523 = vrcp.pop 128.0
        %v524 = vmul.f32 128.0, %v523
        %v525 = vsub.f32 1.0, %v524
        %v526 = vmul.f32 %v523, %v525
        %v527 = vadd.f32 %v523, %v526
        %vm528 = vweird.f32 %v523
        %v529 = vsel %vm528, %v523, %v527
        %v530 = vmul.f32 %v520, %v529
        %v531 = vmul.f32 %v522, %v529
        %v532 = vsub.f32 %v515, %v530
        %v533 = vsub.f32 %v517, %v531
        %v534 = vmul.f32 %v532, %v532
        %v535 = vmul.f32 %v533, %v533
        %536 = vadd.xlane.f32.xlu0 %v534
        %v537 = vpop.xlane.xlu0 %536
        %538 = vadd.xlane.f32.xlu0 %v535
        %v539 = vpop.xlane.xlu0 %538
        %v540 = vmul.f32 %v537, %v529
        %v541 = vmul.f32 %v539, %v529
        %v542 = vadd.f32 %v540, 1e-05
        %v543 = vadd.f32 %v541, 1e-05
        %v544 = vrsqrt.pop %v542
        %v545 = vmul.f32 %v544, %v542
        %v546 = vmul.f32 %v545, %v544
        %v547 = vmul.f32 0.5, %v546
        %v548 = vsub.f32 1.5, %v547
        %v549 = vmul.f32 %v544, %v548
        %vm550 = vweird.f32 %v542
        %vm551 = vweird.f32 %v544
        %vm552 = vmor %vm550, %vm551
        %v553 = vsel %vm552, %v544, %v549
        %v554 = vrsqrt.pop %v543
        %v555 = vmul.f32 %v554, %v543
        %v556 = vmul.f32 %v555, %v554
        %v557 = vmul.f32 0.5, %v556
        %v558 = vsub.f32 1.5, %v557
        %v559 = vmul.f32 %v554, %v558
        %vm560 = vweird.f32 %v543
        %vm561 = vweird.f32 %v554
        %vm562 = vmor %vm560, %vm561
        %v563 = vsel %vm562, %v554, %v559
        %v564 = vmul.f32 %v532, %v553
        %v565 = vmul.f32 %v533, %v563
        %v566 = vld [vmem:[#allocation7] sm:$0x1]
        %v568 = vperm.slane %v566, 0
        %v570 = vmul.f32 %v564, %v568
        %v571 = vmul.f32 %v565, %v568
        %v572 = vld [vmem:[#allocation8] sm:$0x1]
        %v574 = vperm.slane %v572, 0
        %v576 = vadd.f32 %v570, %v574
        %v577 = vadd.f32 %v571, %v574
        %578 = vst [vmem:[%s431] sm:$0xff] %v576
        %579 = vst [vmem:[%s431 + $0x10] sm:$0xff] %v577
        %v580 = vpack.c.bf16 %v577, %v576
        %v581 = vld [vmem:[#allocation10] sm:$0xf]
        %v582 = vld [vmem:[#allocation10 + $0x4] sm:$0xf]
        %v583 = vld [vmem:[#allocation10 + $0x8] sm:$0xf]
        %v584 = vld [vmem:[#allocation10 + $0xc] sm:$0xf]
        %v585 = vld [vmem:[#allocation10 + $0x10] sm:$0xf]
        %v586 = vld [vmem:[#allocation10 + $0x14] sm:$0xf]
        %v587 = vld [vmem:[#allocation10 + $0x18] sm:$0xf]
        %v588 = vld [vmem:[#allocation10 + $0x1c] sm:$0xf]
        %v589 = vld [vmem:[#allocation10 + $0x20] sm:$0xf]
        %v590 = vld [vmem:[#allocation10 + $0x24] sm:$0xf]
        %v591 = vld [vmem:[#allocation10 + $0x28] sm:$0xf]
        %v592 = vld [vmem:[#allocation10 + $0x2c] sm:$0xf]
        %v593 = vld [vmem:[#allocation10 + $0x30] sm:$0xf]
        %v594 = vld [vmem:[#allocation10 + $0x34] sm:$0xf]
        %v595 = vld [vmem:[#allocation10 + $0x38] sm:$0xf]
        %v596 = vld [vmem:[#allocation10 + $0x3c] sm:$0xf]
        %v597 = vld [vmem:[%s6] sm:$0x1]
        %v599 = vperm.slane %v597, 0
        %v617 = vunpack.c.l.b16 %v581
        %v618 = vunpack.c.l.b16 %v582
        %v619 = vunpack.c.l.b16 %v583
        %v620 = vunpack.c.l.b16 %v584
        %v621 = vunpack.c.l.b16 %v585
        %v622 = vunpack.c.l.b16 %v586
        %v623 = vunpack.c.l.b16 %v587
        %v624 = vunpack.c.l.b16 %v588
        %v625 = vunpack.c.l.b16 %v589
        %v626 = vunpack.c.l.b16 %v590
        %v627 = vunpack.c.l.b16 %v591
        %v628 = vunpack.c.l.b16 %v592
        %v629 = vunpack.c.l.b16 %v593
        %v630 = vunpack.c.l.b16 %v594
        %v631 = vunpack.c.l.b16 %v595
        %v632 = vunpack.c.l.b16 %v596
        %v633 = vpack.c.b16 %v618, %v617
        %v634 = vpack.c.b16 %v620, %v619
        %v635 = vpack.c.b16 %v622, %v621
        %v636 = vpack.c.b16 %v624, %v623
        %v637 = vpack.c.b16 %v626, %v625
        %v638 = vpack.c.b16 %v628, %v627
        %v639 = vpack.c.b16 %v630, %v629
        %v640 = vpack.c.b16 %v632, %v631
        %649 = vmatpush.bf16.msra.mxu0 %v640
        %650 = vmatpush.bf16.msra.mxu0 %v639
        %651 = vmatpush.bf16.msra.mxu0 %v638
        %652 = vmatpush.bf16.msra.mxu0 %v637
        %653 = vmatpush.bf16.msra.mxu0 %v636
        %654 = vmatpush.bf16.msra.mxu0 %v635
        %655 = vmatpush.bf16.msra.mxu0 %v634
        %656 = vmatpush.bf16.msra.mxu0 %v633
        %657 = vmatmul.bf16.gmra.mxu0 %v580
        %v658 = vpop.f32.mrf.mxu0
        %v659 = vadd.f32 %v599, %v658
        %v660 = vpop.f32.mrf.mxu0
        %v661 = vadd.f32 %v599, %v660
        %662 = vdwg.mxu0
        %v663 = vpack.c.bf16 %v661, %v659
        %v664 = vld [vmem:[#allocation11] sm:$0xff]
        %v665 = vld [vmem:[#allocation11 + $0x8] sm:$0xff]
        %v666 = vld [vmem:[#allocation11 + $0x10] sm:$0xff]
        %v667 = vld [vmem:[#allocation11 + $0x18] sm:$0xff]
        %v668 = vld [vmem:[#allocation11 + $0x20] sm:$0xff]
        %v669 = vld [vmem:[#allocation11 + $0x28] sm:$0xff]
        %v670 = vld [vmem:[#allocation11 + $0x30] sm:$0xff]
        %v671 = vld [vmem:[#allocation11 + $0x38] sm:$0xff]
        %v672 = vld [vmem:[#allocation11 + $0x40] sm:$0xff]
        %v673 = vld [vmem:[#allocation11 + $0x48] sm:$0xff]
        %v674 = vld [vmem:[#allocation11 + $0x50] sm:$0xff]
        %v675 = vld [vmem:[#allocation11 + $0x58] sm:$0xff]
        %v676 = vld [vmem:[#allocation11 + $0x60] sm:$0xff]
        %v677 = vld [vmem:[#allocation11 + $0x68] sm:$0xff]
        %v678 = vld [vmem:[#allocation11 + $0x70] sm:$0xff]
        %v679 = vld [vmem:[#allocation11 + $0x78] sm:$0xff]
        %v680 = vld [vmem:[%s8] sm:$0x3]
        %v682 = vperm.slane %v680, 0
        %v683 = vperm.slane %v680, 1
        %v702 = vunpack.c.l.b16 %v664
        %v703 = vunpack.c.h.b16 %v664
        %v704 = vunpack.c.l.b16 %v665
        %v705 = vunpack.c.h.b16 %v665
        %v706 = vunpack.c.l.b16 %v666
        %v707 = vunpack.c.h.b16 %v666
        %v708 = vunpack.c.l.b16 %v667
        %v709 = vunpack.c.h.b16 %v667
        %v710 = vunpack.c.l.b16 %v668
        %v711 = vunpack.c.h.b16 %v668
        %v712 = vunpack.c.l.b16 %v669
        %v713 = vunpack.c.h.b16 %v669
        %v714 = vunpack.c.l.b16 %v670
        %v715 = vunpack.c.h.b16 %v670
        %v716 = vunpack.c.l.b16 %v671
        %v717 = vunpack.c.h.b16 %v671
        %v718 = vunpack.c.l.b16 %v672
        %v719 = vunpack.c.h.b16 %v672
        %v720 = vunpack.c.l.b16 %v673
        %v721 = vunpack.c.h.b16 %v673
        %v722 = vunpack.c.l.b16 %v674
        %v723 = vunpack.c.h.b16 %v674
        %v724 = vunpack.c.l.b16 %v675
        %v725 = vunpack.c.h.b16 %v675
        %v726 = vunpack.c.l.b16 %v676
        %v727 = vunpack.c.h.b16 %v676
        %v728 = vunpack.c.l.b16 %v677
        %v729 = vunpack.c.h.b16 %v677
        %v730 = vunpack.c.l.b16 %v678
        %v731 = vunpack.c.h.b16 %v678
        %v732 = vunpack.c.l.b16 %v679
        %v733 = vunpack.c.h.b16 %v679
        %v734 = vpack.c.b16 %v704, %v702
        %v735 = vpack.c.b16 %v705, %v703
        %v736 = vpack.c.b16 %v708, %v706
        %v737 = vpack.c.b16 %v709, %v707
        %v738 = vpack.c.b16 %v712, %v710
        %v739 = vpack.c.b16 %v713, %v711
        %v740 = vpack.c.b16 %v716, %v714
        %v741 = vpack.c.b16 %v717, %v715
        %v742 = vpack.c.b16 %v720, %v718
        %v743 = vpack.c.b16 %v721, %v719
        %v744 = vpack.c.b16 %v724, %v722
        %v745 = vpack.c.b16 %v725, %v723
        %v746 = vpack.c.b16 %v728, %v726
        %v747 = vpack.c.b16 %v729, %v727
        %v748 = vpack.c.b16 %v732, %v730
        %v749 = vpack.c.b16 %v733, %v731
        %766 = vmatpush.bf16.msra.mxu0 %v748
        %767 = vmatpush.bf16.msra.mxu0 %v746
        %768 = vmatpush.bf16.msra.mxu0 %v744
        %769 = vmatpush.bf16.msra.mxu0 %v742
        %770 = vmatpush.bf16.msra.mxu0 %v740
        %771 = vmatpush.bf16.msra.mxu0 %v738
        %772 = vmatpush.bf16.msra.mxu0 %v736
        %773 = vmatpush.bf16.msra.mxu0 %v734
        %774 = vmatmul.bf16.gmra.mxu0 %v663
        %v775 = vpop.f32.mrf.mxu0
        %v776 = vadd.f32 %v682, %v775
        %v777 = vpop.f32.mrf.mxu0
        %v778 = vadd.f32 %v682, %v777
        %779 = vdwg.mxu0
        %780 = vmatpush.bf16.msra.mxu0 %v749
        %781 = vmatpush.bf16.msra.mxu0 %v747
        %782 = vmatpush.bf16.msra.mxu0 %v745
        %783 = vmatpush.bf16.msra.mxu0 %v743
        %784 = vmatpush.bf16.msra.mxu0 %v741
        %785 = vmatpush.bf16.msra.mxu0 %v739
        %786 = vmatpush.bf16.msra.mxu0 %v737
        %787 = vmatpush.bf16.msra.mxu0 %v735
        %788 = vmatmul.bf16.gmra.mxu0 %v663
        %v789 = vpop.f32.mrf.mxu0
        %v790 = vadd.f32 %v683, %v789
        %v791 = vpop.f32.mrf.mxu0
        %v792 = vadd.f32 %v683, %v791
        %793 = vdwg.mxu0
        %v794 = vmax.f32 %v790, 0.0
        %v795 = vmax.f32 %v792, 0.0
        %v796 = vand.u32 2147483647, %v790
        %v797 = vand.u32 2147483647, %v792
        %v798 = vsub.f32 0.0, %v796
        %v799 = vsub.f32 0.0, %v797
        %v800 = vmul.f32 %v798, 1.442695
        %v801 = vpow.pop %v800
        %v802 = vmul.f32 %v799, 1.442695
        %v803 = vpow.pop %v802
        %v804 = vadd.f32 %v801, 1.0
        %v805 = vlog2.pop %v804
        %v806 = vmul.f32 %v805, 0.6931472
        %v807 = vmul.f32 -0.5, %v801
        %v808 = vadd.f32 %v807, 1.0
        %v809 = vmul.f32 %v808, %v801
        %v810 = vand.u32 2147483647, %v801
        %vm811 = vcmp.lt.f32.partialorder %v810, 0.0004427343
        %v812 = vsel %vm811, %v809, %v806
        %v813 = vadd.f32 %v803, 1.0
        %v814 = vlog2.pop %v813
        %v815 = vmul.f32 %v814, 0.6931472
        %v816 = vmul.f32 -0.5, %v803
        %v817 = vadd.f32 %v816, 1.0
        %v818 = vmul.f32 %v817, %v803
        %v819 = vand.u32 2147483647, %v803
        %vm820 = vcmp.lt.f32.partialorder %v819, 0.0004427343
        %v821 = vsel %vm820, %v818, %v815
        %v822 = vadd.f32 %v794, %v812
        %v823 = vadd.f32 %v795, %v821
        %v824 = vsub.f32 %v659, %v776
        %v825 = vsub.f32 %v661, %v778
        %v826 = vrcp.pop %v822
        %v827 = vmul.f32 %v822, %v826
        %v828 = vsub.f32 1.0, %v827
        %v829 = vmul.f32 %v826, %v828
        %v830 = vadd.f32 %v826, %v829
        %vm831 = vweird.f32 %v822
        %vm832 = vweird.f32 %v826
        %vm833 = vmor %vm831, %vm832
        %v834 = vsel %vm833, %v826, %v830
        %v835 = vand.u32 2147483647, %v822
        %vm836 = vcmp.eq.f32.partialorder %v835, 8.507059e+37
        %v837 = vand.u32 %v822, 2147483648
        %v838 = vor.u32 1.1754944e-38, %v837
        %v839 = vsel %vm836, %v838, %v834
        %v840 = vmul.f32 %v824, %v839
        %v841 = vrcp.pop %v823
        %v842 = vmul.f32 %v823, %v841
        %v843 = vsub.f32 1.0, %v842
        %v844 = vmul.f32 %v841, %v843
        %v845 = vadd.f32 %v841, %v844
        %vm846 = vweird.f32 %v823
        %vm847 = vweird.f32 %v841
        %vm848 = vmor %vm846, %vm847
        %v849 = vsel %vm848, %v841, %v845
        %v850 = vand.u32 2147483647, %v823
        %vm851 = vcmp.eq.f32.partialorder %v850, 8.507059e+37
        %v852 = vand.u32 %v823, 2147483648
        %v853 = vor.u32 1.1754944e-38, %v852
        %v854 = vsel %vm851, %v853, %v849
        %v855 = vmul.f32 %v825, %v854
        %v856 = vmul.f32 %v840, -0.5
        %v857 = vmul.f32 %v855, -0.5
        %v858 = vmul.f32 %v856, %v840
        %v859 = vmul.f32 %v857, %v855
        %v860 = vmul.f32 %v858, 1.442695
        %v861 = vpow.pop %v860
        %v862 = vmul.f32 %v859, 1.442695
        %v863 = vpow.pop %v862
        %864 = vst [vmem:[%s431 + $0x8] sm:$0xff] %v861
        %865 = vst [vmem:[%s431 + $0x18] sm:$0xff] %v863
        %s866 = sand.u32 %s231, 1
        %s867 = scalar_lea.sflag [#allocation4], %s866
        %s868 = sand.u32 %s231, 1
        %s869 = smul.addr %s868, 32
        %s870 = scalar_lea.vmem [#allocation13], %s869
        // Predicated region
        $region81: #{tpu_custom_call.1} parent=55 // pred_check
          %p871 = pneg %p241
        $region82: #{tpu_custom_call.1} parent=55 // pred_check_branch
          %873 = sbr.rel (%p871) target = $region84
        $region83: #{tpu_custom_call.1} parent=55 // pred_region
          %s874 = smul.u32 2, %s29
          %876 = vsyncadd %s867, 0
          %s877 = smul.addr %s874, 2
          %s878 = smul.addr %s877, 8
          %s879 = scalar_lea.hbm %s9, %s878
          %s880 = sshll.u32 %s870, 4
          %s881 = int_to_ptr.vmem [resolvable:$true] %s880
          %s882 = sshll.u32 %s879, 4
          %s883 = int_to_ptr.hbm [resolvable:$true] %s882
          %888 = dma.vmem_to_hbm [thread:$0]  %s881, 512, %s883, %s867, 256, 256, 16
        $region84: #{tpu_custom_call.1} parent=55 // pred_fallthru
          _
      $region56: #{tpu_custom_call.1} parent=5 // pred_fallthru
        _
      %p889 = scmp.le.s32.totalorder 2, %s24
      // Predicated region
      $region85: #{tpu_custom_call.1} parent=5 // pred_check
        %p890 = pneg %p889
      $region86: #{tpu_custom_call.1} parent=5 // pred_check_branch
        %892 = sbr.rel (%p890) target = $region88
      $region87: #{tpu_custom_call.1} parent=5 // pred_region
        %s893 = ssub.s32 %s24, 2
        // Predicated region
        $region89: #{tpu_custom_call.1} parent=87 // pred_check
          %p894 = pneg %p247
        $region90: #{tpu_custom_call.1} parent=87 // pred_check_branch
          %896 = sbr.rel (%p894) target = $region92
        $region91: #{tpu_custom_call.1} parent=87 // pred_region
          %s897 = sand.u32 %s232, 1
          %s898 = scalar_lea.sflag [#allocation4], %s897
          %s899 = sand.u32 %s232, 1
          %s900 = smul.addr %s899, 32
          %s901 = scalar_lea.vmem [#allocation13], %s900
          %903 = dma.done %s898, 512
        $region92: #{tpu_custom_call.1} parent=87 // pred_fallthru
          _
      $region88: #{tpu_custom_call.1} parent=5 // pred_fallthru
        _
    $region6: #{tpu_custom_call.1} parent=1 // loop_footer
      %s28 = sadd.s32 1, %s24
    $region7: #{tpu_custom_call.1} parent=1 // loop_footer_branch
      %23 = sbr.rel target = $region3
    $region8: #{tpu_custom_call.1} parent=1 // loop_exit
      _
    %904 = vsyncpa [#allocation3], 1
    %s905 = scalar_lea.sflag [#allocation3], 1
    %906 = vsyncpa %s905, 1
    %907 = vsyncpa [#allocation6], 1
    %908 = vsyncpa [#allocation9], 1
    %909 = vsyncpa [#allocation12], 1
    %910 = vsyncpa [#allocation4], 1
    %s911 = scalar_lea.sflag [#allocation4], 1
    %912 = vsyncpa %s911, 1

</llo_original>
